<compile_context>
chip_gen: v7x
topology: tpu7x:2x2x1
jax: 0.10.0
libtpu: 0.0.40
codegen_flags: <defaults>
</compile_context>

<pallas_src>
import numpy as np
import jax
import jax.numpy as jnp
from jax.experimental import pallas as pl
from jax.experimental.pallas import tpu as pltpu

# Problem size (small, consistent with the module).
N, H, W = 2, 16, 16          # batch, spatial
NI, NF = 4, 8                # in / out channels (ni != nf -> idconv is a real 1x1 conv)
NEMB = 32                    # time-embedding dim
KS = 3
EPS = 1e-5                   # nn.BatchNorm2d default eps

CIP = 128 // W               # input channels zero-padded so W*CIP == 128 (lane dense)
assert W * NF == 128 and W * CIP == 128 and CIP >= NI


def _silu(x):
    return x * jax.nn.sigmoid(x)


# --------------------------------------------------------------------------- kernel
def emb_res_block_kernel(
    x_ref, t_ref,
    g1_ref, b1_ref, p1_ref, w1_ref, c1b_ref,
    wemb_ref, bemb_ref,
    g2_ref, b2_ref, p2_ref, w2_ref,
    wid_ref, ob_ref,
    out_ref,
):
    f32, bf16 = jnp.float32, jnp.bfloat16
    nh, lanes = out_ref.shape            # (N*H, W*NF) = (32, 128)
    n = t_ref.shape[0]
    h = nh // n

    x = x_ref[...].astype(f32)           # (N*H, W*CIP) channel-padded, lane-dense input

    # -- BatchNorm2d (training-mode batch stats, biased var) + SiLU, fully lane-dense --
    # Per-channel mean / E[x^2] are folded over the W positions hiding in the lane dim
    # (and broadcast straight back to packed lanes) via one tiny matmul with a constant
    # projector P[l, l'] = 1/(N*H*W) iff l % C == l' % C.
    def bn_silu(v, p_ref, g_ref, b_ref):
        s = jnp.concatenate(
            [jnp.sum(v, axis=0, keepdims=True),
             jnp.sum(v * v, axis=0, keepdims=True)], axis=0)        # (2, 128)
        st = jnp.dot(s, p_ref[...], preferred_element_type=f32)     # [mean_p; E[x^2]_p]
        mean = st[0:1]
        var = st[1:2] - mean * mean                                 # biased variance
        scale = g_ref[...] * jax.lax.rsqrt(var + EPS)
        bias = b_ref[...] - mean * scale
        return _silu(v * scale + bias)

    # -- 3x3 "same" conv as ONE band matmul -------------------------------------------
    # Vertical taps: three row-shifted copies (zero rows at per-image edges) concatenated
    # along lanes; horizontal taps + zero padding live inside the banded weight matrix.
    def conv3x3(v, w_ref):
        v3 = v.astype(bf16).reshape(n, h, -1)
        zrow = jnp.zeros_like(v3[:, :1])
        above = jnp.concatenate([zrow, v3[:, :-1]], axis=1)   # holds row i-1  (kernel dy=0)
        below = jnp.concatenate([v3[:, 1:], zrow], axis=1)    # holds row i+1  (kernel dy=2)
        patches = jnp.concatenate([above, v3, below], axis=-1).reshape(nh, -1)
        return jnp.dot(patches, w_ref[...], preferred_element_type=f32)

    # conv1 path: BN -> SiLU -> conv (conv1 bias folded into FiLM below)
    h1 = bn_silu(x, p1_ref, g1_ref, b1_ref)
    y1 = conv3x3(h1, w1_ref)                                   # (N*H, 128)

    # FiLM from the time embedding: emb_proj weights are pre-tiled so scale/shift come out
    # already in packed-lane form; conv1 bias is folded into the affine.
    emb = jnp.dot(_silu(t_ref[...].astype(f32)).astype(bf16), wemb_ref[...],
                  preferred_element_type=f32) + bemb_ref[...]  # (N, 2*128)
    gain = 1.0 + emb[:, :lanes]                                # 1 + scale          (N, 128)
    offs = c1b_ref[...] * gain + emb[:, lanes:]                # b1*(1+scale)+shift (N, 128)
    y1 = (y1.reshape(n, h, lanes) * gain[:, None, :]
          + offs[:, None, :]).reshape(nh, lanes)

    # conv2 path
    h2 = bn_silu(y1, p2_ref, g2_ref, b2_ref)
    y2 = conv3x3(h2, w2_ref)                                   # (N*H, 128)

    # residual 1x1 idconv (block-diagonal packed weights) + combined conv2/idconv biases
    idc = jnp.dot(x.astype(bf16), wid_ref[...], preferred_element_type=f32)

    # TODO(synk): attn_chans=0 (module default) => SelfAttention2D branch not instantiated.
    out_ref[...] = (y2 + idc + ob_ref[...]).astype(out_ref.dtype)


# ------------------------------------------------------------------ wrapper / packing
def _band_weight(w_hwio, width):
    """(KS,KS,Cin,Cout) -> (KS*width*Cin, width*Cout) block-Toeplitz band matrix.

    Row block d corresponds to kernel row dy=d.  Within it,
    band[jp*Cin + c, j*Cout + f] = w[d, jp - j + 1, c, f] (zero outside the +/-1 band),
    so horizontal SAME padding is built into the matrix and the 3x3 conv becomes one
    matmul against the three vertically shifted activation copies.
    """
    k, _, cin, cout = w_hwio.shape
    band = np.zeros((k, width * cin, width * cout), np.float32)
    for d in range(k):
        for j in range(width):
            for dx in range(k):
                jp = j + dx - 1
                if 0 <= jp < width:
                    band[d, jp * cin:(jp + 1) * cin, j * cout:(j + 1) * cout] = w_hwio[d, dx]
    return band.reshape(k * width * cin, width * cout)


def _block_diag(w, width):
    cin, cout = w.shape
    out = np.zeros((width * cin, width * cout), np.float32)
    for j in range(width):
        out[j * cin:(j + 1) * cin, j * cout:(j + 1) * cout] = w
    return out


def _stats_proj(c, width, n_elems):
    lane = np.arange(width * c)
    return (lane[:, None] % c == lane[None, :] % c).astype(np.float32) / float(n_elems)


def _tile_lanes(v, width):
    return np.tile(np.asarray(v, np.float32).reshape(1, -1), (1, width))


def pack_params(p):
    """Repack the module parameters into the lane-dense layout the kernel consumes."""
    w1 = np.zeros((KS, KS, CIP, NF), np.float32)
    w1[:, :, :NI, :] = np.asarray(p["w1"], np.float32)          # zero-pad input channels
    wid = np.zeros((CIP, NF), np.float32)
    wid[:NI, :] = np.asarray(p["wid"], np.float32)
    g1 = np.zeros((CIP,), np.float32); g1[:NI] = np.asarray(p["bn1_g"], np.float32)
    b1 = np.zeros((CIP,), np.float32); b1[:NI] = np.asarray(p["bn1_b"], np.float32)

    wemb = np.asarray(p["wemb"], np.float32)
    bemb = np.asarray(p["bemb"], np.float32).reshape(1, -1)
    wemb_t = np.concatenate([np.tile(wemb[:, :NF], (1, W)), np.tile(wemb[:, NF:], (1, W))], 1)
    bemb_t = np.concatenate([np.tile(bemb[:, :NF], (1, W)), np.tile(bemb[:, NF:], (1, W))], 1)

    f32, bf16 = jnp.float32, jnp.bfloat16
    return (
        jnp.asarray(_tile_lanes(g1, W), f32),                        # bn1 gamma (packed)
        jnp.asarray(_tile_lanes(b1, W), f32),                        # bn1 beta  (packed)
        jnp.asarray(_stats_proj(CIP, W, N * H * W), f32),            # BN1 stats projector
        jnp.asarray(_band_weight(w1, W), bf16),                      # conv1 band weights
        jnp.asarray(_tile_lanes(p["b1"], W), f32),                   # conv1 bias (packed)
        jnp.asarray(wemb_t, bf16),                                   # emb_proj W (pre-tiled)
        jnp.asarray(bemb_t, f32),                                    # emb_proj b (pre-tiled)
        jnp.asarray(_tile_lanes(p["bn2_g"], W), f32),                # bn2 gamma (packed)
        jnp.asarray(_tile_lanes(p["bn2_b"], W), f32),                # bn2 beta  (packed)
        jnp.asarray(_stats_proj(NF, W, N * H * W), f32),             # BN2 stats projector
        jnp.asarray(_band_weight(np.asarray(p["w2"], np.float32), W), bf16),   # conv2 band
        jnp.asarray(_block_diag(wid, W), bf16),                      # idconv (block diagonal)
        jnp.asarray(_tile_lanes(np.asarray(p["b2"]) + np.asarray(p["bid"]), W), f32),
    )


def emb_res_block(x, t, packed):
    # Lane-dense input / output slabs: last dim is exactly 128 (unmasked vst).
    xp = jnp.pad(x, ((0, 0), (0, 0), (0, 0), (0, CIP - NI))).reshape(N * H, W * CIP)
    n_in = 2 + len(packed)
    out2d = pl.pallas_call(
        emb_res_block_kernel,
        out_shape=jax.ShapeDtypeStruct((N * H, W * NF), jnp.float32),
        in_specs=[pl.BlockSpec(memory_space=pltpu.MemorySpace.VMEM)] * n_in,
        out_specs=pl.BlockSpec(memory_space=pltpu.MemorySpace.VMEM),
        cost_estimate=pl.CostEstimate(
            flops=7_500_000, transcendentals=8_500, bytes_accessed=450_000),
    )(xp, t, *packed)
    return out2d.reshape(N, H, W, NF)


# ----------------------------------------------------------------------- reference
def ref_forward(x, t, p):
    """Pure-JAX (lax conv) reference with the same bf16 MXU-operand casts the kernel
    uses (f32 accumulation), so the comparison isolates structural correctness."""
    bf16 = jnp.bfloat16

    def bn(v, g, b):
        m = v.mean(axis=(0, 1, 2), keepdims=True)
        var = ((v - m) ** 2).mean(axis=(0, 1, 2), keepdims=True)
        return (v - m) / jnp.sqrt(var + EPS) * g.reshape(1, 1, 1, -1) + b.reshape(1, 1, 1, -1)

    def conv3(v, w, b):
        y = jax.lax.conv_general_dilated(
            v.astype(bf16), w.astype(bf16), window_strides=(1, 1), padding="SAME",
            dimension_numbers=("NHWC", "HWIO", "NHWC"),
            preferred_element_type=jnp.float32)
        return y + b.reshape(1, 1, 1, -1)

    y1 = conv3(jax.nn.silu(bn(x, p["bn1_g"], p["bn1_b"])), p["w1"], p["b1"])
    emb = jnp.dot(jax.nn.silu(t).astype(bf16), p["wemb"].astype(bf16),
                  preferred_element_type=jnp.float32) + p["bemb"]
    scale, shift = emb[:, :NF], emb[:, NF:]
    y1 = y1 * (1.0 + scale[:, None, None, :]) + shift[:, None, None, :]
    y2 = conv3(jax.nn.silu(bn(y1, p["bn2_g"], p["bn2_b"])), p["w2"], p["b2"])
    idc = jnp.dot(x.reshape(-1, NI).astype(bf16), p["wid"].astype(bf16),
                  preferred_element_type=jnp.float32).reshape(N, H, W, NF)
    return y2 + idc + p["bid"].reshape(1, 1, 1, -1)


if __name__ == "__main__":
    key = jax.random.PRNGKey(0)
    ks = jax.random.split(key, 16)

    x = jax.random.normal(ks[0], (N, H, W, NI), jnp.float32)     # NHWC activations
    t = jax.random.normal(ks[1], (N, NEMB), jnp.float32)

    params = dict(
        bn1_g=1.0 + 0.1 * jax.random.normal(ks[2], (NI,), jnp.float32),
        bn1_b=0.1 * jax.random.normal(ks[3], (NI,), jnp.float32),
        w1=0.1 * jax.random.normal(ks[4], (KS, KS, NI, NF), jnp.float32),   # HWIO
        b1=0.1 * jax.random.normal(ks[5], (NF,), jnp.float32),
        wemb=0.1 * jax.random.normal(ks[6], (NEMB, 2 * NF), jnp.float32),
        bemb=0.1 * jax.random.normal(ks[7], (2 * NF,), jnp.float32),
        bn2_g=1.0 + 0.1 * jax.random.normal(ks[8], (NF,), jnp.float32),
        bn2_b=0.1 * jax.random.normal(ks[9], (NF,), jnp.float32),
        w2=0.1 * jax.random.normal(ks[10], (KS, KS, NF, NF), jnp.float32),
        b2=0.1 * jax.random.normal(ks[11], (NF,), jnp.float32),
        wid=0.1 * jax.random.normal(ks[12], (NI, NF), jnp.float32),
        bid=0.1 * jax.random.normal(ks[13], (NF,), jnp.float32),
    )

    out = emb_res_block(x, t, pack_params(params))
    out = jax.block_until_ready(out)

    ref = ref_forward(x, t, params)
    assert out.shape == (N, H, W, NF)
    max_err = float(jnp.max(jnp.abs(out - ref)))
    # Tolerance sized for bf16 MXU-operand rounding (~2^-8) propagated through two conv
    # layers; any structural error produces discrepancies orders of magnitude larger.
    assert jnp.allclose(out, ref, atol=1e-2, rtol=1e-2), max_err

    print("KERNEL_OK")
</pallas_src>

<mosaic_0001>
module attributes {stable_mosaic.version = 11 : i64} {
  func.func @emb_res_block_kernel(%arg0: memref<32x128xf32, #tpu.memory_space<vmem>>, %arg1: memref<2x32xf32, #tpu.memory_space<vmem>>, %arg2: memref<1x128xf32, #tpu.memory_space<vmem>>, %arg3: memref<1x128xf32, #tpu.memory_space<vmem>>, %arg4: memref<128x128xf32, #tpu.memory_space<vmem>>, %arg5: memref<384x128xbf16, #tpu.memory_space<vmem>>, %arg6: memref<1x128xf32, #tpu.memory_space<vmem>>, %arg7: memref<32x256xbf16, #tpu.memory_space<vmem>>, %arg8: memref<1x256xf32, #tpu.memory_space<vmem>>, %arg9: memref<1x128xf32, #tpu.memory_space<vmem>>, %arg10: memref<1x128xf32, #tpu.memory_space<vmem>>, %arg11: memref<128x128xf32, #tpu.memory_space<vmem>>, %arg12: memref<384x128xbf16, #tpu.memory_space<vmem>>, %arg13: memref<128x128xbf16, #tpu.memory_space<vmem>>, %arg14: memref<1x128xf32, #tpu.memory_space<vmem>>, %arg15: memref<32x128xf32, #tpu.memory_space<vmem>>) attributes {dimension_semantics = [], scalar_prefetch = 0 : i64, scratch_operands = 0 : i64, tpu.core_type = #tpu.core_type<tc>} {
    %c0 = arith.constant 0 : index
    %c0_0 = arith.constant 0 : index
    %0 = vector.load %arg0[%c0, %c0_0] : memref<32x128xf32, #tpu.memory_space<vmem>>, vector<32x128xf32>
    %cst = arith.constant dense<0.000000e+00> : vector<128xf32>
    %1 = vector.multi_reduction <add>, %0, %cst [0] : vector<32x128xf32> to vector<128xf32>
    %2 = vector.shape_cast %1 : vector<128xf32> to vector<1x128xf32>
    %3 = arith.mulf %0, %0 : vector<32x128xf32>
    %cst_1 = arith.constant dense<0.000000e+00> : vector<128xf32>
    %4 = vector.multi_reduction <add>, %3, %cst_1 [0] : vector<32x128xf32> to vector<128xf32>
    %5 = vector.shape_cast %4 : vector<128xf32> to vector<1x128xf32>
    %6 = tpu.concatenate %2, %5 in 0 : vector<1x128xf32>, vector<1x128xf32> -> vector<2x128xf32>
    %c0_2 = arith.constant 0 : index
    %c0_3 = arith.constant 0 : index
    %7 = vector.load %arg4[%c0_2, %c0_3] : memref<128x128xf32, #tpu.memory_space<vmem>>, vector<128x128xf32>
    %cst_4 = arith.constant dense<0.000000e+00> : vector<2x128xf32>
    %8 = tpu.matmul %6, %7, %cst_4 {dimension_numbers = #tpu.dot_dimension_numbers<[1], [0], [0], [1], [0, 0, 1, 1], [], []>} : vector<2x128xf32>, vector<128x128xf32>, vector<2x128xf32> -> vector<2x128xf32>
    %9 = vector.extract_strided_slice %8 {offsets = [0, 0], sizes = [1, 128], strides = [1, 1]} : vector<2x128xf32> to vector<1x128xf32>
    %10 = vector.extract_strided_slice %8 {offsets = [1, 0], sizes = [1, 128], strides = [1, 1]} : vector<2x128xf32> to vector<1x128xf32>
    %11 = arith.mulf %9, %9 : vector<1x128xf32>
    %12 = arith.subf %10, %11 : vector<1x128xf32>
    %c0_5 = arith.constant 0 : index
    %c0_6 = arith.constant 0 : index
    %13 = vector.load %arg2[%c0_5, %c0_6] : memref<1x128xf32, #tpu.memory_space<vmem>>, vector<1x128xf32>
    %cst_7 = arith.constant 9.99999974E-6 : f32
    %14 = vector.broadcast %cst_7 : f32 to vector<1x128xf32>
    %15 = arith.addf %12, %14 : vector<1x128xf32>
    %16 = math.rsqrt %15 : vector<1x128xf32>
    %17 = arith.mulf %13, %16 : vector<1x128xf32>
    %c0_8 = arith.constant 0 : index
    %c0_9 = arith.constant 0 : index
    %18 = vector.load %arg3[%c0_8, %c0_9] : memref<1x128xf32, #tpu.memory_space<vmem>>, vector<1x128xf32>
    %19 = arith.mulf %9, %17 : vector<1x128xf32>
    %20 = arith.subf %18, %19 : vector<1x128xf32>
    %21 = vector.broadcast %17 : vector<1x128xf32> to vector<32x128xf32>
    %22 = arith.mulf %0, %21 : vector<32x128xf32>
    %23 = vector.broadcast %20 : vector<1x128xf32> to vector<32x128xf32>
    %24 = arith.addf %22, %23 : vector<32x128xf32>
    %25 = arith.negf %24 : vector<32x128xf32>
    %26 = math.exp %25 : vector<32x128xf32>
    %cst_10 = arith.constant 1.000000e+00 : f32
    %27 = vector.broadcast %cst_10 : f32 to vector<32x128xf32>
    %28 = arith.addf %27, %26 : vector<32x128xf32>
    %29 = arith.divf %27, %28 : vector<32x128xf32>
    %30 = arith.mulf %24, %29 : vector<32x128xf32>
    %31 = arith.truncf %30 : vector<32x128xf32> to vector<32x128xbf16>
    %32 = vector.shape_cast %31 : vector<32x128xbf16> to vector<2x16x128xbf16>
    %cst_11 = arith.constant 0.000000e+00 : bf16
    %33 = vector.broadcast %cst_11 : bf16 to vector<2x1x128xbf16>
    %34 = vector.extract_strided_slice %32 {offsets = [0, 0, 0], sizes = [2, 15, 128], strides = [1, 1, 1]} : vector<2x16x128xbf16> to vector<2x15x128xbf16>
    %35 = tpu.concatenate %33, %34 in 1 : vector<2x1x128xbf16>, vector<2x15x128xbf16> -> vector<2x16x128xbf16>
    %36 = vector.extract_strided_slice %32 {offsets = [0, 1, 0], sizes = [2, 15, 128], strides = [1, 1, 1]} : vector<2x16x128xbf16> to vector<2x15x128xbf16>
    %37 = tpu.concatenate %36, %33 in 1 : vector<2x15x128xbf16>, vector<2x1x128xbf16> -> vector<2x16x128xbf16>
    %38 = tpu.concatenate %35, %32, %37 in 2 : vector<2x16x128xbf16>, vector<2x16x128xbf16>, vector<2x16x128xbf16> -> vector<2x16x384xbf16>
    %39 = vector.shape_cast %38 : vector<2x16x384xbf16> to vector<32x384xbf16>
    %c0_12 = arith.constant 0 : index
    %c0_13 = arith.constant 0 : index
    %40 = vector.load %arg5[%c0_12, %c0_13] : memref<384x128xbf16, #tpu.memory_space<vmem>>, vector<384x128xbf16>
    %cst_14 = arith.constant dense<0.000000e+00> : vector<32x128xf32>
    %41 = tpu.matmul %39, %40, %cst_14 {dimension_numbers = #tpu.dot_dimension_numbers<[1], [0], [0], [1], [0, 0, 1, 1], [], []>} : vector<32x384xbf16>, vector<384x128xbf16>, vector<32x128xf32> -> vector<32x128xf32>
    %c0_15 = arith.constant 0 : index
    %c0_16 = arith.constant 0 : index
    %42 = vector.load %arg1[%c0_15, %c0_16] : memref<2x32xf32, #tpu.memory_space<vmem>>, vector<2x32xf32>
    %43 = arith.negf %42 : vector<2x32xf32>
    %44 = math.exp %43 : vector<2x32xf32>
    %cst_17 = arith.constant 1.000000e+00 : f32
    %45 = vector.broadcast %cst_17 : f32 to vector<2x32xf32>
    %46 = arith.addf %45, %44 : vector<2x32xf32>
    %47 = arith.divf %45, %46 : vector<2x32xf32>
    %48 = arith.mulf %42, %47 : vector<2x32xf32>
    %49 = arith.truncf %48 : vector<2x32xf32> to vector<2x32xbf16>
    %c0_18 = arith.constant 0 : index
    %c0_19 = arith.constant 0 : index
    %50 = vector.load %arg7[%c0_18, %c0_19] : memref<32x256xbf16, #tpu.memory_space<vmem>>, vector<32x256xbf16>
    %cst_20 = arith.constant dense<0.000000e+00> : vector<2x256xf32>
    %51 = tpu.matmul %49, %50, %cst_20 {dimension_numbers = #tpu.dot_dimension_numbers<[1], [0], [0], [1], [0, 0, 1, 1], [], []>} : vector<2x32xbf16>, vector<32x256xbf16>, vector<2x256xf32> -> vector<2x256xf32>
    %c0_21 = arith.constant 0 : index
    %c0_22 = arith.constant 0 : index
    %52 = vector.load %arg8[%c0_21, %c0_22] : memref<1x256xf32, #tpu.memory_space<vmem>>, vector<1x256xf32>
    %53 = vector.broadcast %52 : vector<1x256xf32> to vector<2x256xf32>
    %54 = arith.addf %51, %53 : vector<2x256xf32>
    %55 = vector.extract_strided_slice %54 {offsets = [0, 0], sizes = [2, 128], strides = [1, 1]} : vector<2x256xf32> to vector<2x128xf32>
    %cst_23 = arith.constant 1.000000e+00 : f32
    %56 = vector.broadcast %cst_23 : f32 to vector<2x128xf32>
    %57 = arith.addf %56, %55 : vector<2x128xf32>
    %c0_24 = arith.constant 0 : index
    %c0_25 = arith.constant 0 : index
    %58 = vector.load %arg6[%c0_24, %c0_25] : memref<1x128xf32, #tpu.memory_space<vmem>>, vector<1x128xf32>
    %59 = vector.broadcast %58 : vector<1x128xf32> to vector<2x128xf32>
    %60 = arith.mulf %59, %57 : vector<2x128xf32>
    %61 = vector.extract_strided_slice %54 {offsets = [0, 128], sizes = [2, 128], strides = [1, 1]} : vector<2x256xf32> to vector<2x128xf32>
    %62 = arith.addf %60, %61 : vector<2x128xf32>
    %63 = vector.shape_cast %41 : vector<32x128xf32> to vector<2x16x128xf32>
    %64 = vector.shape_cast %57 : vector<2x128xf32> to vector<2x1x128xf32>
    %65 = vector.broadcast %64 : vector<2x1x128xf32> to vector<2x16x128xf32>
    %66 = arith.mulf %63, %65 : vector<2x16x128xf32>
    %67 = vector.shape_cast %62 : vector<2x128xf32> to vector<2x1x128xf32>
    %68 = vector.broadcast %67 : vector<2x1x128xf32> to vector<2x16x128xf32>
    %69 = arith.addf %66, %68 : vector<2x16x128xf32>
    %70 = vector.shape_cast %69 : vector<2x16x128xf32> to vector<32x128xf32>
    %cst_26 = arith.constant dense<0.000000e+00> : vector<128xf32>
    %71 = vector.multi_reduction <add>, %70, %cst_26 [0] : vector<32x128xf32> to vector<128xf32>
    %72 = vector.shape_cast %71 : vector<128xf32> to vector<1x128xf32>
    %73 = arith.mulf %70, %70 : vector<32x128xf32>
    %cst_27 = arith.constant dense<0.000000e+00> : vector<128xf32>
    %74 = vector.multi_reduction <add>, %73, %cst_27 [0] : vector<32x128xf32> to vector<128xf32>
    %75 = vector.shape_cast %74 : vector<128xf32> to vector<1x128xf32>
    %76 = tpu.concatenate %72, %75 in 0 : vector<1x128xf32>, vector<1x128xf32> -> vector<2x128xf32>
    %c0_28 = arith.constant 0 : index
    %c0_29 = arith.constant 0 : index
    %77 = vector.load %arg11[%c0_28, %c0_29] : memref<128x128xf32, #tpu.memory_space<vmem>>, vector<128x128xf32>
    %cst_30 = arith.constant dense<0.000000e+00> : vector<2x128xf32>
    %78 = tpu.matmul %76, %77, %cst_30 {dimension_numbers = #tpu.dot_dimension_numbers<[1], [0], [0], [1], [0, 0, 1, 1], [], []>} : vector<2x128xf32>, vector<128x128xf32>, vector<2x128xf32> -> vector<2x128xf32>
    %79 = vector.extract_strided_slice %78 {offsets = [0, 0], sizes = [1, 128], strides = [1, 1]} : vector<2x128xf32> to vector<1x128xf32>
    %80 = vector.extract_strided_slice %78 {offsets = [1, 0], sizes = [1, 128], strides = [1, 1]} : vector<2x128xf32> to vector<1x128xf32>
    %81 = arith.mulf %79, %79 : vector<1x128xf32>
    %82 = arith.subf %80, %81 : vector<1x128xf32>
    %c0_31 = arith.constant 0 : index
    %c0_32 = arith.constant 0 : index
    %83 = vector.load %arg9[%c0_31, %c0_32] : memref<1x128xf32, #tpu.memory_space<vmem>>, vector<1x128xf32>
    %cst_33 = arith.constant 9.99999974E-6 : f32
    %84 = vector.broadcast %cst_33 : f32 to vector<1x128xf32>
    %85 = arith.addf %82, %84 : vector<1x128xf32>
    %86 = math.rsqrt %85 : vector<1x128xf32>
    %87 = arith.mulf %83, %86 : vector<1x128xf32>
    %c0_34 = arith.constant 0 : index
    %c0_35 = arith.constant 0 : index
    %88 = vector.load %arg10[%c0_34, %c0_35] : memref<1x128xf32, #tpu.memory_space<vmem>>, vector<1x128xf32>
    %89 = arith.mulf %79, %87 : vector<1x128xf32>
    %90 = arith.subf %88, %89 : vector<1x128xf32>
    %91 = vector.broadcast %87 : vector<1x128xf32> to vector<32x128xf32>
    %92 = arith.mulf %70, %91 : vector<32x128xf32>
    %93 = vector.broadcast %90 : vector<1x128xf32> to vector<32x128xf32>
    %94 = arith.addf %92, %93 : vector<32x128xf32>
    %95 = arith.negf %94 : vector<32x128xf32>
    %96 = math.exp %95 : vector<32x128xf32>
    %cst_36 = arith.constant 1.000000e+00 : f32
    %97 = vector.broadcast %cst_36 : f32 to vector<32x128xf32>
    %98 = arith.addf %97, %96 : vector<32x128xf32>
    %99 = arith.divf %97, %98 : vector<32x128xf32>
    %100 = arith.mulf %94, %99 : vector<32x128xf32>
    %101 = arith.truncf %100 : vector<32x128xf32> to vector<32x128xbf16>
    %102 = vector.shape_cast %101 : vector<32x128xbf16> to vector<2x16x128xbf16>
    %cst_37 = arith.constant 0.000000e+00 : bf16
    %103 = vector.broadcast %cst_37 : bf16 to vector<2x1x128xbf16>
    %104 = vector.extract_strided_slice %102 {offsets = [0, 0, 0], sizes = [2, 15, 128], strides = [1, 1, 1]} : vector<2x16x128xbf16> to vector<2x15x128xbf16>
    %105 = tpu.concatenate %103, %104 in 1 : vector<2x1x128xbf16>, vector<2x15x128xbf16> -> vector<2x16x128xbf16>
    %106 = vector.extract_strided_slice %102 {offsets = [0, 1, 0], sizes = [2, 15, 128], strides = [1, 1, 1]} : vector<2x16x128xbf16> to vector<2x15x128xbf16>
    %107 = tpu.concatenate %106, %103 in 1 : vector<2x15x128xbf16>, vector<2x1x128xbf16> -> vector<2x16x128xbf16>
    %108 = tpu.concatenate %105, %102, %107 in 2 : vector<2x16x128xbf16>, vector<2x16x128xbf16>, vector<2x16x128xbf16> -> vector<2x16x384xbf16>
    %109 = vector.shape_cast %108 : vector<2x16x384xbf16> to vector<32x384xbf16>
    %c0_38 = arith.constant 0 : index
    %c0_39 = arith.constant 0 : index
    %110 = vector.load %arg12[%c0_38, %c0_39] : memref<384x128xbf16, #tpu.memory_space<vmem>>, vector<384x128xbf16>
    %cst_40 = arith.constant dense<0.000000e+00> : vector<32x128xf32>
    %111 = tpu.matmul %109, %110, %cst_40 {dimension_numbers = #tpu.dot_dimension_numbers<[1], [0], [0], [1], [0, 0, 1, 1], [], []>} : vector<32x384xbf16>, vector<384x128xbf16>, vector<32x128xf32> -> vector<32x128xf32>
    %112 = arith.truncf %0 : vector<32x128xf32> to vector<32x128xbf16>
    %c0_41 = arith.constant 0 : index
    %c0_42 = arith.constant 0 : index
    %113 = vector.load %arg13[%c0_41, %c0_42] : memref<128x128xbf16, #tpu.memory_space<vmem>>, vector<128x128xbf16>
    %cst_43 = arith.constant dense<0.000000e+00> : vector<32x128xf32>
    %114 = tpu.matmul %112, %113, %cst_43 {dimension_numbers = #tpu.dot_dimension_numbers<[1], [0], [0], [1], [0, 0, 1, 1], [], []>} : vector<32x128xbf16>, vector<128x128xbf16>, vector<32x128xf32> -> vector<32x128xf32>
    %115 = arith.addf %111, %114 : vector<32x128xf32>
    %c0_44 = arith.constant 0 : index
    %c0_45 = arith.constant 0 : index
    %116 = vector.load %arg14[%c0_44, %c0_45] : memref<1x128xf32, #tpu.memory_space<vmem>>, vector<1x128xf32>
    %117 = vector.broadcast %116 : vector<1x128xf32> to vector<32x128xf32>
    %118 = arith.addf %115, %117 : vector<32x128xf32>
    %c0_46 = arith.constant 0 : index
    %c0_47 = arith.constant 0 : index
    %119 = vector.load %arg15[%c0_46, %c0_47] : memref<32x128xf32, #tpu.memory_space<vmem>>, vector<32x128xf32>
    tpu.vector_store %arg15[%c0_46, %c0_47], %118 {strides = array<i32>} : memref<32x128xf32, #tpu.memory_space<vmem>>, vector<32x128xf32>,
    return
  }
}

</mosaic_0001>

<llo_original>
// kernel: tpu_custom_call.1
$region0: #{tpu_custom_call.1}
  #allocation0 [shape = 'u32[]', space=smem, size = 0x4, offset = 0x4, fixed_abs, tag = 'smem constant byte address 0x4 - core index']
  #allocation1 [shape = 'u32[144,128]{1,0:T(1,128)}', space=vmem, size = 0x12000, scoped, tag = 'internal scratch']
  %s0 = inlined_call_operand.hbm [shape: f32[32,128], index: 0, kind: input, shape index: {}]
  %s1 = inlined_call_operand.vmem [shape: f32[2,32], index: 1, kind: input, shape index: {}]
  %s2 = inlined_call_operand.vmem [shape: f32[1,128], index: 2, kind: input, shape index: {}]
  %s3 = inlined_call_operand.vmem [shape: f32[1,128], index: 3, kind: input, shape index: {}]
  %s4 = inlined_call_operand.hbm [shape: f32[128,128], index: 4, kind: input, shape index: {}]
  %s5 = inlined_call_operand.hbm [shape: bf16[384,128], index: 5, kind: input, shape index: {}]
  %s6 = inlined_call_operand.vmem [shape: f32[1,128], index: 6, kind: input, shape index: {}]
  %s7 = inlined_call_operand.hbm [shape: bf16[32,256], index: 7, kind: input, shape index: {}]
  %s8 = inlined_call_operand.vmem [shape: f32[1,256], index: 8, kind: input, shape index: {}]
  %s9 = inlined_call_operand.vmem [shape: f32[1,128], index: 9, kind: input, shape index: {}]
  %s10 = inlined_call_operand.vmem [shape: f32[1,128], index: 10, kind: input, shape index: {}]
  %s11 = inlined_call_operand.hbm [shape: f32[128,128], index: 11, kind: input, shape index: {}]
  %s12 = inlined_call_operand.hbm [shape: bf16[384,128], index: 12, kind: input, shape index: {}]
  %s13 = inlined_call_operand.hbm [shape: bf16[128,128], index: 13, kind: input, shape index: {}]
  %s14 = inlined_call_operand.vmem [shape: f32[1,128], index: 14, kind: input, shape index: {}]
  %s15 = inlined_call_operand.hbm [shape: f32[32,128], index: 15, kind: output, shape index: {}]
  %s16 = sld [smem:[#allocation0]]
  $region98: #{tpu_custom_call.1} parent=0
    _
  %s18 = ssub.s32 1, %s16
  %s19 = scalar_select 0, %s18, %s16
  $region1: #{tpu_custom_call.1} parent=0
    #allocation2 [shape = 'u8[16384]{0}', space=vmem, size = 0x4000, scoped, tag = 'input window, operand 0, single buffered']
    #allocation3 [shape = 's32[1]{0}', space=sflag, size = 0x4, scoped, tag = 'scoped memory for tpu_custom_call.1']
    #allocation4 [shape = 's32[1]{0}', space=sflag, size = 0x4, scoped, tag = 'scoped memory for tpu_custom_call.1']
    #allocation5 [shape = 'u8[65536]{0}', space=vmem, size = 0x10000, scoped, tag = 'input window, operand 4, single buffered']
    #allocation6 [shape = 's32[1]{0}', space=sflag, size = 0x4, scoped, tag = 'scoped memory for tpu_custom_call.1']
    #allocation7 [shape = 'u8[98304]{0}', space=vmem, size = 0x18000, scoped, tag = 'input window, operand 5, single buffered']
    #allocation8 [shape = 'u8[16384]{0}', space=vmem, size = 0x4000, scoped, tag = 'input window, operand 7, single buffered']
    #allocation9 [shape = 's32[1]{0}', space=sflag, size = 0x4, scoped, tag = 'scoped memory for tpu_custom_call.1']
    #allocation10 [shape = 'u8[65536]{0}', space=vmem, size = 0x10000, scoped, tag = 'input window, operand 11, single buffered']
    #allocation11 [shape = 'u8[98304]{0}', space=vmem, size = 0x18000, scoped, tag = 'input window, operand 12, single buffered']
    #allocation12 [shape = 's32[1]{0}', space=sflag, size = 0x4, scoped, tag = 'scoped memory for tpu_custom_call.1']
    #allocation13 [shape = 'u8[32768]{0}', space=vmem, size = 0x8000, scoped, tag = 'input window, operand 13, single buffered']
    #allocation14 [shape = 'u8[16384]{0}', space=vmem, size = 0x4000, scoped, tag = 'output window, operand 0, single buffered']
    %20 = vsyncpa [#allocation3], 0
    %21 = vsyncpa [#allocation6], 0
    %22 = vsyncpa [#allocation9], 0
    %23 = vsyncpa [#allocation12], 0
    %24 = vsyncpa [#allocation4], 0
    // Predicated region
    $region2: #{tpu_custom_call.1} parent=1 // pred_check
      _
    $region3: #{tpu_custom_call.1} parent=1 // pred_check_branch
      %26 = sbr.rel (0) target = $region5
    $region4: #{tpu_custom_call.1} parent=1 // pred_region
      %s28 = ssub.s32 512, 512
      %29 = vsyncadd [#allocation3], %s28
      %s30 = sshll.u32 [#allocation2], 4
      %s31 = int_to_ptr.vmem [resolvable:$true] %s30
      %36 = dma.hbm_to_vmem [thread:$0]  %s0, 512, %s31, [#allocation3], 128, 128, 8
    $region5: #{tpu_custom_call.1} parent=1 // pred_fallthru
      _
    // Predicated region
    $region6: #{tpu_custom_call.1} parent=1 // pred_check
      _
    $region7: #{tpu_custom_call.1} parent=1 // pred_check_branch
      %38 = sbr.rel (0) target = $region9
    $region8: #{tpu_custom_call.1} parent=1 // pred_region
      _
    $region9: #{tpu_custom_call.1} parent=1 // pred_fallthru
      _
    // Predicated region
    $region10: #{tpu_custom_call.1} parent=1 // pred_check
      _
    $region11: #{tpu_custom_call.1} parent=1 // pred_check_branch
      %40 = sbr.rel (0) target = $region13
    $region12: #{tpu_custom_call.1} parent=1 // pred_region
      _
    $region13: #{tpu_custom_call.1} parent=1 // pred_fallthru
      _
    // Predicated region
    $region14: #{tpu_custom_call.1} parent=1 // pred_check
      _
    $region15: #{tpu_custom_call.1} parent=1 // pred_check_branch
      %42 = sbr.rel (0) target = $region17
    $region16: #{tpu_custom_call.1} parent=1 // pred_region
      _
    $region17: #{tpu_custom_call.1} parent=1 // pred_fallthru
      _
    // Predicated region
    $region18: #{tpu_custom_call.1} parent=1 // pred_check
      _
    $region19: #{tpu_custom_call.1} parent=1 // pred_check_branch
      %44 = sbr.rel (0) target = $region21
    $region20: #{tpu_custom_call.1} parent=1 // pred_region
      %s46 = ssub.s32 2048, 2048
      %47 = vsyncadd [#allocation6], %s46
      %s48 = sshll.u32 [#allocation5], 4
      %s49 = int_to_ptr.vmem [resolvable:$true] %s48
      %54 = dma.hbm_to_vmem [thread:$0]  %s4, 2048, %s49, [#allocation6], 128, 128, 8
    $region21: #{tpu_custom_call.1} parent=1 // pred_fallthru
      _
    // Predicated region
    $region22: #{tpu_custom_call.1} parent=1 // pred_check
      _
    $region23: #{tpu_custom_call.1} parent=1 // pred_check_branch
      %56 = sbr.rel (0) target = $region25
    $region24: #{tpu_custom_call.1} parent=1 // pred_region
      %s58 = ssub.s32 3072, 3072
      %59 = vsyncadd [#allocation6], %s58
      %s60 = sshll.u32 [#allocation7], 4
      %s61 = int_to_ptr.vmem [resolvable:$true] %s60
      %66 = dma.hbm_to_vmem [thread:$0]  %s5, 3072, %s61, [#allocation6], 64, 64, 4
    $region25: #{tpu_custom_call.1} parent=1 // pred_fallthru
      _
    // Predicated region
    $region26: #{tpu_custom_call.1} parent=1 // pred_check
      _
    $region27: #{tpu_custom_call.1} parent=1 // pred_check_branch
      %68 = sbr.rel (0) target = $region29
    $region28: #{tpu_custom_call.1} parent=1 // pred_region
      _
    $region29: #{tpu_custom_call.1} parent=1 // pred_fallthru
      _
    // Predicated region
    $region30: #{tpu_custom_call.1} parent=1 // pred_check
      _
    $region31: #{tpu_custom_call.1} parent=1 // pred_check_branch
      %70 = sbr.rel (0) target = $region33
    $region32: #{tpu_custom_call.1} parent=1 // pred_region
      %s72 = ssub.s32 512, 512
      %73 = vsyncadd [#allocation9], %s72
      %s74 = sshll.u32 [#allocation8], 4
      %s75 = int_to_ptr.vmem [resolvable:$true] %s74
      %80 = dma.hbm_to_vmem [thread:$0]  %s7, 512, %s75, [#allocation9], 128, 128, 8
    $region33: #{tpu_custom_call.1} parent=1 // pred_fallthru
      _
    // Predicated region
    $region34: #{tpu_custom_call.1} parent=1 // pred_check
      _
    $region35: #{tpu_custom_call.1} parent=1 // pred_check_branch
      %82 = sbr.rel (0) target = $region37
    $region36: #{tpu_custom_call.1} parent=1 // pred_region
      _
    $region37: #{tpu_custom_call.1} parent=1 // pred_fallthru
      _
    // Predicated region
    $region38: #{tpu_custom_call.1} parent=1 // pred_check
      _
    $region39: #{tpu_custom_call.1} parent=1 // pred_check_branch
      %84 = sbr.rel (0) target = $region41
    $region40: #{tpu_custom_call.1} parent=1 // pred_region
      _
    $region41: #{tpu_custom_call.1} parent=1 // pred_fallthru
      _
    // Predicated region
    $region42: #{tpu_custom_call.1} parent=1 // pred_check
      _
    $region43: #{tpu_custom_call.1} parent=1 // pred_check_branch
      %86 = sbr.rel (0) target = $region45
    $region44: #{tpu_custom_call.1} parent=1 // pred_region
      _
    $region45: #{tpu_custom_call.1} parent=1 // pred_fallthru
      _
    // Predicated region
    $region46: #{tpu_custom_call.1} parent=1 // pred_check
      _
    $region47: #{tpu_custom_call.1} parent=1 // pred_check_branch
      %88 = sbr.rel (0) target = $region49
    $region48: #{tpu_custom_call.1} parent=1 // pred_region
      %s90 = ssub.s32 2048, 2048
      %91 = vsyncadd [#allocation9], %s90
      %s92 = sshll.u32 [#allocation10], 4
      %s93 = int_to_ptr.vmem [resolvable:$true] %s92
      %98 = dma.hbm_to_vmem [thread:$0]  %s11, 2048, %s93, [#allocation9], 128, 128, 8
    $region49: #{tpu_custom_call.1} parent=1 // pred_fallthru
      _
    // Predicated region
    $region50: #{tpu_custom_call.1} parent=1 // pred_check
      _
    $region51: #{tpu_custom_call.1} parent=1 // pred_check_branch
      %100 = sbr.rel (0) target = $region53
    $region52: #{tpu_custom_call.1} parent=1 // pred_region
      %s102 = ssub.s32 3072, 3072
      %103 = vsyncadd [#allocation12], %s102
      %s104 = sshll.u32 [#allocation11], 4
      %s105 = int_to_ptr.vmem [resolvable:$true] %s104
      %110 = dma.hbm_to_vmem [thread:$0]  %s12, 3072, %s105, [#allocation12], 64, 64, 4
    $region53: #{tpu_custom_call.1} parent=1 // pred_fallthru
      _
    // Predicated region
    $region54: #{tpu_custom_call.1} parent=1 // pred_check
      _
    $region55: #{tpu_custom_call.1} parent=1 // pred_check_branch
      %112 = sbr.rel (0) target = $region57
    $region56: #{tpu_custom_call.1} parent=1 // pred_region
      %s114 = ssub.s32 1024, 1024
      %115 = vsyncadd [#allocation12], %s114
      %s116 = sshll.u32 [#allocation13], 4
      %s117 = int_to_ptr.vmem [resolvable:$true] %s116
      %122 = dma.hbm_to_vmem [thread:$0]  %s13, 1024, %s117, [#allocation12], 64, 64, 4
    $region57: #{tpu_custom_call.1} parent=1 // pred_fallthru
      _
    // Predicated region
    $region58: #{tpu_custom_call.1} parent=1 // pred_check
      _
    $region59: #{tpu_custom_call.1} parent=1 // pred_check_branch
      %124 = sbr.rel (0) target = $region61
    $region60: #{tpu_custom_call.1} parent=1 // pred_region
      _
    $region61: #{tpu_custom_call.1} parent=1 // pred_fallthru
      _
    // Predicated region
    $region62: #{tpu_custom_call.1} parent=1 // pred_check
      _
    $region63: #{tpu_custom_call.1} parent=1 // pred_check_branch
      %126 = sbr.rel (0) target = $region65
    $region64: #{tpu_custom_call.1} parent=1 // pred_region
      %127 = dma.done [#allocation3], 512
    $region65: #{tpu_custom_call.1} parent=1 // pred_fallthru
      _
    // Predicated region
    $region66: #{tpu_custom_call.1} parent=1 // pred_check
      _
    $region67: #{tpu_custom_call.1} parent=1 // pred_check_branch
      %129 = sbr.rel (0) target = $region69
    $region68: #{tpu_custom_call.1} parent=1 // pred_region
      %130 = dma.done [#allocation6], 2048
    $region69: #{tpu_custom_call.1} parent=1 // pred_fallthru
      _
    // Predicated region
    $region70: #{tpu_custom_call.1} parent=1 // pred_check
      _
    $region71: #{tpu_custom_call.1} parent=1 // pred_check_branch
      %132 = sbr.rel (0) target = $region73
    $region72: #{tpu_custom_call.1} parent=1 // pred_region
      %133 = dma.done [#allocation6], 3072
    $region73: #{tpu_custom_call.1} parent=1 // pred_fallthru
      _
    // Predicated region
    $region74: #{tpu_custom_call.1} parent=1 // pred_check
      _
    $region75: #{tpu_custom_call.1} parent=1 // pred_check_branch
      %135 = sbr.rel (0) target = $region77
    $region76: #{tpu_custom_call.1} parent=1 // pred_region
      %136 = dma.done [#allocation9], 512
    $region77: #{tpu_custom_call.1} parent=1 // pred_fallthru
      _
    // Predicated region
    $region78: #{tpu_custom_call.1} parent=1 // pred_check
      _
    $region79: #{tpu_custom_call.1} parent=1 // pred_check_branch
      %138 = sbr.rel (0) target = $region81
    $region80: #{tpu_custom_call.1} parent=1 // pred_region
      %139 = dma.done [#allocation9], 2048
    $region81: #{tpu_custom_call.1} parent=1 // pred_fallthru
      _
    // Predicated region
    $region82: #{tpu_custom_call.1} parent=1 // pred_check
      _
    $region83: #{tpu_custom_call.1} parent=1 // pred_check_branch
      %141 = sbr.rel (0) target = $region85
    $region84: #{tpu_custom_call.1} parent=1 // pred_region
      %142 = dma.done [#allocation12], 3072
    $region85: #{tpu_custom_call.1} parent=1 // pred_fallthru
      _
    // Predicated region
    $region86: #{tpu_custom_call.1} parent=1 // pred_check
      _
    $region87: #{tpu_custom_call.1} parent=1 // pred_check_branch
      %144 = sbr.rel (0) target = $region89
    $region88: #{tpu_custom_call.1} parent=1 // pred_region
      %145 = dma.done [#allocation12], 1024
    $region89: #{tpu_custom_call.1} parent=1 // pred_fallthru
      _
    %v147 = vld [vmem:[#allocation2] sm:$0xff]
    %v148 = vld [vmem:[#allocation2 + $0x8] sm:$0xff]
    %v149 = vld [vmem:[#allocation2 + $0x10] sm:$0xff]
    %v150 = vld [vmem:[#allocation2 + $0x18] sm:$0xff]
    %v151 = vadd.f32 %v147, %v148
    %v152 = vadd.f32 %v151, %v149
    %v153 = vadd.f32 %v152, %v150
    %v154 = vrot.slane %v153, 4
    %v155 = vadd.f32 %v153, %v154
    %v156 = vrot.slane %v155, 2
    %v157 = vadd.f32 %v155, %v156
    %v158 = vrot.slane %v157, 1
    %v159 = vadd.f32 %v157, %v158
    %v160 = vmul.f32 %v147, %v147
    %v161 = vmul.f32 %v148, %v148
    %v162 = vmul.f32 %v149, %v149
    %v163 = vmul.f32 %v150, %v150
    %v164 = vadd.f32 %v160, %v161
    %v165 = vadd.f32 %v164, %v162
    %v166 = vadd.f32 %v165, %v163
    %v167 = vrot.slane %v166, 4
    %v168 = vadd.f32 %v166, %v167
    %v169 = vrot.slane %v168, 2
    %v170 = vadd.f32 %v168, %v169
    %v171 = vrot.slane %v170, 1
    %v172 = vadd.f32 %v170, %v171
    %vm173 = vcmask 1040384
    %v174 = vsel %vm173, %v159, %v172
    %v175 = vld [vmem:[#allocation5] sm:$0xff]
    %v176 = vld [vmem:[#allocation5 + $0x8] sm:$0xff]
    %v177 = vld [vmem:[#allocation5 + $0x10] sm:$0xff]
    %v178 = vld [vmem:[#allocation5 + $0x18] sm:$0xff]
    %v179 = vld [vmem:[#allocation5 + $0x20] sm:$0xff]
    %v180 = vld [vmem:[#allocation5 + $0x28] sm:$0xff]
    %v181 = vld [vmem:[#allocation5 + $0x30] sm:$0xff]
    %v182 = vld [vmem:[#allocation5 + $0x38] sm:$0xff]
    %v183 = vld [vmem:[#allocation5 + $0x40] sm:$0xff]
    %v184 = vld [vmem:[#allocation5 + $0x48] sm:$0xff]
    %v185 = vld [vmem:[#allocation5 + $0x50] sm:$0xff]
    %v186 = vld [vmem:[#allocation5 + $0x58] sm:$0xff]
    %v187 = vld [vmem:[#allocation5 + $0x60] sm:$0xff]
    %v188 = vld [vmem:[#allocation5 + $0x68] sm:$0xff]
    %v189 = vld [vmem:[#allocation5 + $0x70] sm:$0xff]
    %v190 = vld [vmem:[#allocation5 + $0x78] sm:$0xff]
    %191 = vmatprep.subr.mxu0 0.0
    %192 = vmatpush1.msra.mxu0 %v175
    %193 = vmatprep.subr.mxu0 0.0
    %194 = vmatpush1.msra.mxu0 %v176
    %195 = vmatprep.subr.mxu0 0.0
    %196 = vmatpush1.msra.mxu0 %v177
    %197 = vmatprep.subr.mxu0 0.0
    %198 = vmatpush1.msra.mxu0 %v178
    %199 = vmatprep.subr.mxu0 0.0
    %200 = vmatpush1.msra.mxu0 %v179
    %201 = vmatprep.subr.mxu0 0.0
    %202 = vmatpush1.msra.mxu0 %v180
    %203 = vmatprep.subr.mxu0 0.0
    %204 = vmatpush1.msra.mxu0 %v181
    %205 = vmatprep.subr.mxu0 0.0
    %206 = vmatpush1.msra.mxu0 %v182
    %207 = vmatprep.subr.mxu0 0.0
    %208 = vmatpush1.msra.mxu0 %v183
    %209 = vmatprep.subr.mxu0 0.0
    %210 = vmatpush1.msra.mxu0 %v184
    %211 = vmatprep.subr.mxu0 0.0
    %212 = vmatpush1.msra.mxu0 %v185
    %213 = vmatprep.subr.mxu0 0.0
    %214 = vmatpush1.msra.mxu0 %v186
    %215 = vmatprep.subr.mxu0 0.0
    %216 = vmatpush1.msra.mxu0 %v187
    %217 = vmatprep.subr.mxu0 0.0
    %218 = vmatpush1.msra.mxu0 %v188
    %219 = vmatprep.subr.mxu0 0.0
    %220 = vmatpush1.msra.mxu0 %v189
    %221 = vmatprep.subr.mxu0 0.0
    %222 = vmatpush1.msra.mxu0 %v190
    %223 = vmatprep.subr.mxu0 0.0
    %224 = vmatpush1.msra.mxu0 0.0
    %225 = vmatprep.subr.mxu0 0.0
    %226 = vmatpush1.msra.mxu0 0.0
    %227 = vmatprep.subr.mxu0 0.0
    %228 = vmatpush1.msra.mxu0 0.0
    %229 = vmatprep.subr.mxu0 0.0
    %230 = vmatpush1.msra.mxu0 0.0
    %231 = vmatprep.subr.mxu0 0.0
    %232 = vmatpush1.msra.mxu0 0.0
    %233 = vmatprep.subr.mxu0 0.0
    %234 = vmatpush1.msra.mxu0 0.0
    %235 = vmatprep.subr.mxu0 0.0
    %236 = vmatpush1.msra.mxu0 0.0
    %237 = vmatprep.subr.mxu0 0.0
    %238 = vmatpush1.msra.mxu0 0.0
    %239 = vmatprep.subr.mxu0 0.0
    %240 = vmatpush1.msra.mxu0 0.0
    %241 = vmatprep.subr.mxu0 0.0
    %242 = vmatpush1.msra.mxu0 0.0
    %243 = vmatprep.subr.mxu0 0.0
    %244 = vmatpush1.msra.mxu0 0.0
    %245 = vmatprep.subr.mxu0 0.0
    %246 = vmatpush1.msra.mxu0 0.0
    %247 = vmatprep.subr.mxu0 0.0
    %248 = vmatpush1.msra.mxu0 0.0
    %249 = vmatprep.subr.mxu0 0.0
    %250 = vmatpush1.msra.mxu0 0.0
    %251 = vmatprep.subr.mxu0 0.0
    %252 = vmatpush1.msra.mxu0 0.0
    %253 = vmatprep.subr.mxu0 0.0
    %254 = vmatpush1.msra.mxu0 0.0
    %255 = vmatprep.mubr.f32.mxu0 0.0
    %256 = vmatmul.mubr.f32.gmra.mrb[0].mxu0 %v174
    %v257 = vpop.f32.mrb[0].mxu0
    %v258 = vadd.f32 0.0, %v257
    %v259 = vpop.f32.mrb[0].mxu0
    %260 = vdwg.mxu0
    %v261 = vmul.f32 %v258, %v258
    %v263 = vrot.slane %v261, 7
    %v265 = vsub.f32 %v258, %v263
    %v266 = vld [vmem:[%s2] sm:$0x1]
    %v267 = vadd.f32 %v265, 1e-05
    %v268 = vrsqrt.pop %v267
    %v271 = vunpack.c.l.s4 1966171168
    %v272 = vunpack.c.0.s8 %v271
    %v273 = vlaneseq
    %v274 = vshrl.u32 %v273, 7
    %v275 = vsub.s32 %v272, %v274
    %v276 = vrot.slane %v268, %v275
    %v277 = vcombine.high %v276, %v276
    %v279 = vunpack.c.l.s4 1966171168
    %v280 = vunpack.c.0.s8 %v279
    %v281 = vlaneseq
    %v282 = vshrl.u32 %v281, 7
    %v283 = vsub.s32 %v280, %v282
    %v284 = vrot.slane %v277, %v283
    %v286 = vmul.f32 %v266, %v284
    %v287 = vld [vmem:[%s3] sm:$0x1]
    %v288 = vmul.f32 %v258, %v286
    %v289 = vsub.f32 %v287, %v288
    %v291 = vlaneseq
    %v292 = vshrl.u32 %v291, 7
    %v293 = vsub.s32 0, %v292
    %v294 = vrot.slane %v286, %v293
    %v296 = vmul.f32 %v147, %v294
    %v297 = vmul.f32 %v148, %v294
    %v298 = vmul.f32 %v149, %v294
    %v299 = vmul.f32 %v150, %v294
    %v301 = vlaneseq
    %v302 = vshrl.u32 %v301, 7
    %v303 = vsub.s32 0, %v302
    %v304 = vrot.slane %v289, %v303
    %v306 = vadd.f32 %v296, %v304
    %v307 = vadd.f32 %v297, %v304
    %v308 = vadd.f32 %v298, %v304
    %v309 = vadd.f32 %v299, %v304
    %v310 = vxor.u32 %v306, 2147483648
    %v311 = vxor.u32 %v307, 2147483648
    %v312 = vxor.u32 %v308, 2147483648
    %v313 = vxor.u32 %v309, 2147483648
    %v314 = vmul.f32 %v310, 1.442695
    %v315 = vpow.pop %v314
    %v316 = vmul.f32 %v311, 1.442695
    %v317 = vpow.pop %v316
    %v318 = vmul.f32 %v312, 1.442695
    %v319 = vpow.pop %v318
    %v320 = vmul.f32 %v313, 1.442695
    %v321 = vpow.pop %v320
    %v322 = vadd.f32 %v315, 1.0
    %v323 = vadd.f32 %v317, 1.0
    %v324 = vadd.f32 %v319, 1.0
    %v325 = vadd.f32 %v321, 1.0
    %v326 = vrcp.pop %v322
    %v327 = vmul.f32 1.0, %v326
    %v328 = vrcp.pop %v323
    %v329 = vmul.f32 1.0, %v328
    %v330 = vrcp.pop %v324
    %v331 = vmul.f32 1.0, %v330
    %v332 = vrcp.pop %v325
    %v333 = vmul.f32 1.0, %v332
    %v334 = vmul.f32 %v306, %v327
    %v335 = vmul.f32 %v307, %v329
    %v336 = vmul.f32 %v308, %v331
    %v337 = vmul.f32 %v309, %v333
    %v338 = vpack.c.bf16 %v335, %v334
    %v339 = vpack.c.bf16 %v337, %v336
    %v341 = vshrl.u32 %v338, 16
    %v343 = vrot.slane %v341, 7
    %v344 = vshll.u32 %v338, 16
    %v346 = vor.u32 %v343, %v344
    %v348 = vshrl.u32 %v339, 16
    %v350 = vrot.slane %v348, 7
    %v351 = vshll.u32 %v339, 16
    %v353 = vor.u32 %v350, %v351
    %vm356 = vcmask 1040384
    %vm357 = vsmask.f32 256
    %vm358 = vmand %vm356, %vm357
    %v359 = vsel %vm358, 0, %v346
    %v360 = vsel %vm358, 0, %v353
    %v361 = vrot.slane %v344, 1
    %v362 = vor.u32 %v341, %v361
    %v363 = vrot.slane %v351, 1
    %v364 = vor.u32 %v348, %v363
    %vm367 = vcmask 1047552
    %vm368 = vsmask.f32 7424
    %vm369 = vmand %vm367, %vm368
    %v370 = vsel %vm369, %v362, 0
    %v371 = vsel %vm369, %v364, 0
    %v372 = vld [vmem:[#allocation7] sm:$0xf]
    %v373 = vld [vmem:[#allocation7 + $0x4] sm:$0xf]
    %v374 = vld [vmem:[#allocation7 + $0x8] sm:$0xf]
    %v375 = vld [vmem:[#allocation7 + $0xc] sm:$0xf]
    %v376 = vld [vmem:[#allocation7 + $0x10] sm:$0xf]
    %v377 = vld [vmem:[#allocation7 + $0x14] sm:$0xf]
    %v378 = vld [vmem:[#allocation7 + $0x18] sm:$0xf]
    %v379 = vld [vmem:[#allocation7 + $0x1c] sm:$0xf]
    %v380 = vld [vmem:[#allocation7 + $0x20] sm:$0xf]
    %v381 = vld [vmem:[#allocation7 + $0x24] sm:$0xf]
    %v382 = vld [vmem:[#allocation7 + $0x28] sm:$0xf]
    %v383 = vld [vmem:[#allocation7 + $0x2c] sm:$0xf]
    %v384 = vld [vmem:[#allocation7 + $0x30] sm:$0xf]
    %v385 = vld [vmem:[#allocation7 + $0x34] sm:$0xf]
    %v386 = vld [vmem:[#allocation7 + $0x38] sm:$0xf]
    %v387 = vld [vmem:[#allocation7 + $0x3c] sm:$0xf]
    %v388 = vld [vmem:[#allocation7 + $0x40] sm:$0xf]
    %v389 = vld [vmem:[#allocation7 + $0x44] sm:$0xf]
    %v390 = vld [vmem:[#allocation7 + $0x48] sm:$0xf]
    %v391 = vld [vmem:[#allocation7 + $0x4c] sm:$0xf]
    %v392 = vld [vmem:[#allocation7 + $0x50] sm:$0xf]
    %v393 = vld [vmem:[#allocation7 + $0x54] sm:$0xf]
    %v394 = vld [vmem:[#allocation7 + $0x58] sm:$0xf]
    %v395 = vld [vmem:[#allocation7 + $0x5c] sm:$0xf]
    %v396 = vld [vmem:[#allocation7 + $0x60] sm:$0xf]
    %v397 = vld [vmem:[#allocation7 + $0x64] sm:$0xf]
    %v398 = vld [vmem:[#allocation7 + $0x68] sm:$0xf]
    %v399 = vld [vmem:[#allocation7 + $0x6c] sm:$0xf]
    %v400 = vld [vmem:[#allocation7 + $0x70] sm:$0xf]
    %v401 = vld [vmem:[#allocation7 + $0x74] sm:$0xf]
    %v402 = vld [vmem:[#allocation7 + $0x78] sm:$0xf]
    %v403 = vld [vmem:[#allocation7 + $0x7c] sm:$0xf]
    %v404 = vld [vmem:[#allocation7 + $0x80] sm:$0xf]
    %v405 = vld [vmem:[#allocation7 + $0x84] sm:$0xf]
    %v406 = vld [vmem:[#allocation7 + $0x88] sm:$0xf]
    %v407 = vld [vmem:[#allocation7 + $0x8c] sm:$0xf]
    %v408 = vld [vmem:[#allocation7 + $0x90] sm:$0xf]
    %v409 = vld [vmem:[#allocation7 + $0x94] sm:$0xf]
    %v410 = vld [vmem:[#allocation7 + $0x98] sm:$0xf]
    %v411 = vld [vmem:[#allocation7 + $0x9c] sm:$0xf]
    %v412 = vld [vmem:[#allocation7 + $0xa0] sm:$0xf]
    %v413 = vld [vmem:[#allocation7 + $0xa4] sm:$0xf]
    %v414 = vld [vmem:[#allocation7 + $0xa8] sm:$0xf]
    %v415 = vld [vmem:[#allocation7 + $0xac] sm:$0xf]
    %v416 = vld [vmem:[#allocation7 + $0xb0] sm:$0xf]
    %v417 = vld [vmem:[#allocation7 + $0xb4] sm:$0xf]
    %v418 = vld [vmem:[#allocation7 + $0xb8] sm:$0xf]
    %v419 = vld [vmem:[#allocation7 + $0xbc] sm:$0xf]
    %v468 = vunpack.c.l.b16 %v372
    %v469 = vunpack.c.l.b16 %v373
    %v470 = vunpack.c.l.b16 %v374
    %v471 = vunpack.c.l.b16 %v375
    %v472 = vunpack.c.l.b16 %v376
    %v473 = vunpack.c.l.b16 %v377
    %v474 = vunpack.c.l.b16 %v378
    %v475 = vunpack.c.l.b16 %v379
    %v476 = vunpack.c.l.b16 %v380
    %v477 = vunpack.c.l.b16 %v381
    %v478 = vunpack.c.l.b16 %v382
    %v479 = vunpack.c.l.b16 %v383
    %v480 = vunpack.c.l.b16 %v384
    %v481 = vunpack.c.l.b16 %v385
    %v482 = vunpack.c.l.b16 %v386
    %v483 = vunpack.c.l.b16 %v387
    %v484 = vunpack.c.l.b16 %v388
    %v485 = vunpack.c.l.b16 %v389
    %v486 = vunpack.c.l.b16 %v390
    %v487 = vunpack.c.l.b16 %v391
    %v488 = vunpack.c.l.b16 %v392
    %v489 = vunpack.c.l.b16 %v393
    %v490 = vunpack.c.l.b16 %v394
    %v491 = vunpack.c.l.b16 %v395
    %v492 = vunpack.c.l.b16 %v396
    %v493 = vunpack.c.l.b16 %v397
    %v494 = vunpack.c.l.b16 %v398
    %v495 = vunpack.c.l.b16 %v399
    %v496 = vunpack.c.l.b16 %v400
    %v497 = vunpack.c.l.b16 %v401
    %v498 = vunpack.c.l.b16 %v402
    %v499 = vunpack.c.l.b16 %v403
    %v500 = vunpack.c.l.b16 %v404
    %v501 = vunpack.c.l.b16 %v405
    %v502 = vunpack.c.l.b16 %v406
    %v503 = vunpack.c.l.b16 %v407
    %v504 = vunpack.c.l.b16 %v408
    %v505 = vunpack.c.l.b16 %v409
    %v506 = vunpack.c.l.b16 %v410
    %v507 = vunpack.c.l.b16 %v411
    %v508 = vunpack.c.l.b16 %v412
    %v509 = vunpack.c.l.b16 %v413
    %v510 = vunpack.c.l.b16 %v414
    %v511 = vunpack.c.l.b16 %v415
    %v512 = vunpack.c.l.b16 %v416
    %v513 = vunpack.c.l.b16 %v417
    %v514 = vunpack.c.l.b16 %v418
    %v515 = vunpack.c.l.b16 %v419
    %v516 = vpack.c.b16 %v469, %v468
    %v517 = vpack.c.b16 %v471, %v470
    %v518 = vpack.c.b16 %v473, %v472
    %v519 = vpack.c.b16 %v475, %v474
    %v520 = vpack.c.b16 %v477, %v476
    %v521 = vpack.c.b16 %v479, %v478
    %v522 = vpack.c.b16 %v481, %v480
    %v523 = vpack.c.b16 %v483, %v482
    %v524 = vpack.c.b16 %v485, %v484
    %v525 = vpack.c.b16 %v487, %v486
    %v526 = vpack.c.b16 %v489, %v488
    %v527 = vpack.c.b16 %v491, %v490
    %v528 = vpack.c.b16 %v493, %v492
    %v529 = vpack.c.b16 %v495, %v494
    %v530 = vpack.c.b16 %v497, %v496
    %v531 = vpack.c.b16 %v499, %v498
    %v532 = vpack.c.b16 %v501, %v500
    %v533 = vpack.c.b16 %v503, %v502
    %v534 = vpack.c.b16 %v505, %v504
    %v535 = vpack.c.b16 %v507, %v506
    %v536 = vpack.c.b16 %v509, %v508
    %v537 = vpack.c.b16 %v511, %v510
    %v538 = vpack.c.b16 %v513, %v512
    %v539 = vpack.c.b16 %v515, %v514
    %564 = vmatprep.subr.bf16.mxu0 0
    %565 = vmatpush1.bf16.msra.mxu0 %v516
    %566 = vmatprep.subr.bf16.mxu0 0
    %567 = vmatpush1.bf16.msra.mxu0 %v517
    %568 = vmatprep.subr.bf16.mxu0 0
    %569 = vmatpush1.bf16.msra.mxu0 %v518
    %570 = vmatprep.subr.bf16.mxu0 0
    %571 = vmatpush1.bf16.msra.mxu0 %v519
    %572 = vmatprep.subr.bf16.mxu0 0
    %573 = vmatpush1.bf16.msra.mxu0 %v520
    %574 = vmatprep.subr.bf16.mxu0 0
    %575 = vmatpush1.bf16.msra.mxu0 %v521
    %576 = vmatprep.subr.bf16.mxu0 0
    %577 = vmatpush1.bf16.msra.mxu0 %v522
    %578 = vmatprep.subr.bf16.mxu0 0
    %579 = vmatpush1.bf16.msra.mxu0 %v523
    %580 = vmatprep.subr.bf16.mxu0 0
    %581 = vmatpush1.bf16.msra.mxu0 %v524
    %582 = vmatprep.subr.bf16.mxu0 0
    %583 = vmatpush1.bf16.msra.mxu0 %v525
    %584 = vmatprep.subr.bf16.mxu0 0
    %585 = vmatpush1.bf16.msra.mxu0 %v526
    %586 = vmatprep.subr.bf16.mxu0 0
    %587 = vmatpush1.bf16.msra.mxu0 %v527
    %588 = vmatprep.subr.bf16.mxu0 0
    %589 = vmatpush1.bf16.msra.mxu0 %v528
    %590 = vmatprep.subr.bf16.mxu0 0
    %591 = vmatpush1.bf16.msra.mxu0 %v529
    %592 = vmatprep.subr.bf16.mxu0 0
    %593 = vmatpush1.bf16.msra.mxu0 %v530
    %594 = vmatprep.subr.bf16.mxu0 0
    %595 = vmatpush1.bf16.msra.mxu0 %v531
    %596 = vmatprep.mubr.bf16.mxu0 %v338
    %597 = vmatmul.mubr.bf16.gmra.mrb[0].mxu0 %v359
    %v598 = vpop.f32.mrb[0].mxu0
    %v599 = vadd.f32 0.0, %v598
    %v600 = vpop.f32.mrb[0].mxu0
    %v601 = vpop.f32.mrb[0].mxu0
    %v602 = vadd.f32 0.0, %v601
    %v603 = vpop.f32.mrb[0].mxu0
    %604 = vmatprep.mubr.bf16.mxu0 %v339
    %605 = vmatmul.mubr.bf16.gmra.mrb[0].mxu0 %v360
    %v606 = vpop.f32.mrb[0].mxu0
    %v607 = vadd.f32 0.0, %v606
    %v608 = vpop.f32.mrb[0].mxu0
    %v609 = vpop.f32.mrb[0].mxu0
    %v610 = vadd.f32 0.0, %v609
    %v611 = vpop.f32.mrb[0].mxu0
    %612 = vdwg.mxu0
    %613 = vmatprep.subr.bf16.mxu0 0
    %614 = vmatpush1.bf16.msra.mxu0 %v532
    %615 = vmatprep.subr.bf16.mxu0 0
    %616 = vmatpush1.bf16.msra.mxu0 %v533
    %617 = vmatprep.subr.bf16.mxu0 0
    %618 = vmatpush1.bf16.msra.mxu0 %v534
    %619 = vmatprep.subr.bf16.mxu0 0
    %620 = vmatpush1.bf16.msra.mxu0 %v535
    %621 = vmatprep.subr.bf16.mxu0 0
    %622 = vmatpush1.bf16.msra.mxu0 %v536
    %623 = vmatprep.subr.bf16.mxu0 0
    %624 = vmatpush1.bf16.msra.mxu0 %v537
    %625 = vmatprep.subr.bf16.mxu0 0
    %626 = vmatpush1.bf16.msra.mxu0 %v538
    %627 = vmatprep.subr.bf16.mxu0 0
    %628 = vmatpush1.bf16.msra.mxu0 %v539
    %629 = vmatprep.subr.bf16.mxu0 0
    %630 = vmatpush1.bf16.msra.mxu0 0
    %631 = vmatprep.subr.bf16.mxu0 0
    %632 = vmatpush1.bf16.msra.mxu0 0
    %633 = vmatprep.subr.bf16.mxu0 0
    %634 = vmatpush1.bf16.msra.mxu0 0
    %635 = vmatprep.subr.bf16.mxu0 0
    %636 = vmatpush1.bf16.msra.mxu0 0
    %637 = vmatprep.subr.bf16.mxu0 0
    %638 = vmatpush1.bf16.msra.mxu0 0
    %639 = vmatprep.subr.bf16.mxu0 0
    %640 = vmatpush1.bf16.msra.mxu0 0
    %641 = vmatprep.subr.bf16.mxu0 0
    %642 = vmatpush1.bf16.msra.mxu0 0
    %643 = vmatprep.subr.bf16.mxu0 0
    %644 = vmatpush1.bf16.msra.mxu0 0
    %645 = vmatprep.mubr.bf16.mxu0 0
    %646 = vmatmul.mubr.bf16.gmra.mrb[0].mxu0 %v370
    %v647 = vpop.f32.mrb[0].mxu0
    %v648 = vadd.f32 %v599, %v647
    %v649 = vpop.f32.mrb[0].mxu0
    %v650 = vpop.f32.mrb[0].mxu0
    %v651 = vadd.f32 %v602, %v650
    %v652 = vpop.f32.mrb[0].mxu0
    %653 = vmatprep.mubr.bf16.mxu0 0
    %654 = vmatmul.mubr.bf16.gmra.mrb[0].mxu0 %v371
    %v655 = vpop.f32.mrb[0].mxu0
    %v656 = vadd.f32 %v607, %v655
    %v657 = vpop.f32.mrb[0].mxu0
    %v658 = vpop.f32.mrb[0].mxu0
    %v659 = vadd.f32 %v610, %v658
    %v660 = vpop.f32.mrb[0].mxu0
    %661 = vdwg.mxu0
    %v662 = vld [vmem:[%s1] sm:$0x3]
    %v663 = vxor.u32 %v662, 2147483648
    %v664 = vmul.f32 %v663, 1.442695
    %v665 = vpow.pop %v664
    %v666 = vadd.f32 %v665, 1.0
    %v667 = vrcp.pop %v666
    %v668 = vmul.f32 1.0, %v667
    %v669 = vmul.f32 %v662, %v668
    %v670 = vpack.c.bf16 %v669, %v669
    %v671 = vld [vmem:[#allocation8] sm:$0xff]
    %v672 = vld [vmem:[#allocation8 + $0x8] sm:$0xff]
    %v673 = vld [vmem:[#allocation8 + $0x10] sm:$0xff]
    %v674 = vld [vmem:[#allocation8 + $0x18] sm:$0xff]
    %v675 = vld [vmem:[%s8] sm:$0x3]
    %v677 = vlaneseq
    %v678 = vshrl.u32 %v677, 7
    %v679 = vsub.s32 0, %v678
    %v680 = vrot.slane %v675, %v679
    %v681 = vlaneseq
    %v682 = vshrl.u32 %v681, 7
    %v683 = vsub.s32 1, %v682
    %v684 = vrot.slane %v675, %v683
    %v691 = vunpack.c.l.b16 %v671
    %v692 = vunpack.c.h.b16 %v671
    %v693 = vunpack.c.l.b16 %v672
    %v694 = vunpack.c.h.b16 %v672
    %v695 = vunpack.c.l.b16 %v673
    %v696 = vunpack.c.h.b16 %v673
    %v697 = vunpack.c.l.b16 %v674
    %v698 = vunpack.c.h.b16 %v674
    %v699 = vpack.c.b16 %v693, %v691
    %v700 = vpack.c.b16 %v694, %v692
    %v701 = vpack.c.b16 %v697, %v695
    %v702 = vpack.c.b16 %v698, %v696
    %vm707 = vcmask 261120
    %v709 = vsel %vm707, %v670, 0
    %711 = vmatprep.subr.bf16.mxu0 %v700
    %712 = vmatpush1.bf16.msra.mxu0 %v699
    %713 = vmatprep.subr.bf16.mxu0 %v702
    %714 = vmatpush1.bf16.msra.mxu0 %v701
    %715 = vmatprep.subr.bf16.mxu0 0
    %716 = vmatpush1.bf16.msra.mxu0 0
    %717 = vmatprep.subr.bf16.mxu0 0
    %718 = vmatpush1.bf16.msra.mxu0 0
    %719 = vmatprep.subr.bf16.mxu0 0
    %720 = vmatpush1.bf16.msra.mxu0 0
    %721 = vmatprep.subr.bf16.mxu0 0
    %722 = vmatpush1.bf16.msra.mxu0 0
    %723 = vmatprep.subr.bf16.mxu0 0
    %724 = vmatpush1.bf16.msra.mxu0 0
    %725 = vmatprep.subr.bf16.mxu0 0
    %726 = vmatpush1.bf16.msra.mxu0 0
    %727 = vmatprep.subr.bf16.mxu0 0
    %728 = vmatpush1.bf16.msra.mxu0 0
    %729 = vmatprep.subr.bf16.mxu0 0
    %730 = vmatpush1.bf16.msra.mxu0 0
    %731 = vmatprep.subr.bf16.mxu0 0
    %732 = vmatpush1.bf16.msra.mxu0 0
    %733 = vmatprep.subr.bf16.mxu0 0
    %734 = vmatpush1.bf16.msra.mxu0 0
    %735 = vmatprep.subr.bf16.mxu0 0
    %736 = vmatpush1.bf16.msra.mxu0 0
    %737 = vmatprep.subr.bf16.mxu0 0
    %738 = vmatpush1.bf16.msra.mxu0 0
    %739 = vmatprep.subr.bf16.mxu0 0
    %740 = vmatpush1.bf16.msra.mxu0 0
    %741 = vmatprep.subr.bf16.mxu0 0
    %742 = vmatpush1.bf16.msra.mxu0 0
    %743 = vmatprep.mubr.bf16.mxu0 0
    %744 = vmatmul.mubr.bf16.gmra.mrb[0].mxu0 %v709
    %v745 = vpop.f32.mrb[0].mxu0
    %v746 = vadd.f32 %v680, %v745
    %v747 = vpop.f32.mrb[0].mxu0
    %v748 = vadd.f32 %v684, %v747
    %v749 = vpop.f32.mrb[0].mxu0
    %v750 = vpop.f32.mrb[0].mxu0
    %751 = vdwg.mxu0
    %v752 = vadd.f32 %v746, 1.0
    %v753 = vld [vmem:[%s6] sm:$0x1]
    %v755 = vlaneseq
    %v756 = vshrl.u32 %v755, 7
    %v757 = vsub.s32 0, %v756
    %v758 = vrot.slane %v753, %v757
    %v760 = vmul.f32 %v758, %v752
    %v761 = vadd.f32 %v760, %v748
    %v764 = vunpack.c.l.s4 1966171168
    %v765 = vunpack.c.0.s8 %v764
    %v766 = vlaneseq
    %v767 = vshrl.u32 %v766, 7
    %v768 = vsub.s32 %v765, %v767
    %v769 = vrot.slane %v752, %v768
    %v770 = vcombine.high %v769, %v769
    %v772 = vunpack.c.l.s4 1966171168
    %v773 = vunpack.c.0.s8 %v772
    %v774 = vlaneseq
    %v775 = vshrl.u32 %v774, 7
    %v776 = vsub.s32 %v773, %v775
    %v777 = vrot.slane %v769, %v776
    %v779 = vunpack.c.l.s4 1966171168
    %v780 = vunpack.c.0.s8 %v779
    %v781 = vlaneseq
    %v782 = vshrl.u32 %v781, 7
    %v783 = vsub.s32 %v780, %v782
    %v784 = vrot.slane %v770, %v783
    %v785 = vlaneseq
    %v786 = vshrl.u32 %v785, 7
    %v787 = vsub.s32 0, %v786
    %v788 = vrot.slane %v777, %v787
    %v789 = vlaneseq
    %v790 = vshrl.u32 %v789, 7
    %v791 = vsub.s32 0, %v790
    %v792 = vrot.slane %v784, %v791
    %v795 = vmul.f32 %v648, %v788
    %v796 = vmul.f32 %v651, %v788
    %v797 = vmul.f32 %v656, %v792
    %v798 = vmul.f32 %v659, %v792
    %v801 = vunpack.c.l.s4 1966171168
    %v802 = vunpack.c.0.s8 %v801
    %v803 = vlaneseq
    %v804 = vshrl.u32 %v803, 7
    %v805 = vsub.s32 %v802, %v804
    %v806 = vrot.slane %v761, %v805
    %v807 = vcombine.high %v806, %v806
    %v809 = vunpack.c.l.s4 1966171168
    %v810 = vunpack.c.0.s8 %v809
    %v811 = vlaneseq
    %v812 = vshrl.u32 %v811, 7
    %v813 = vsub.s32 %v810, %v812
    %v814 = vrot.slane %v806, %v813
    %v816 = vunpack.c.l.s4 1966171168
    %v817 = vunpack.c.0.s8 %v816
    %v818 = vlaneseq
    %v819 = vshrl.u32 %v818, 7
    %v820 = vsub.s32 %v817, %v819
    %v821 = vrot.slane %v807, %v820
    %v822 = vlaneseq
    %v823 = vshrl.u32 %v822, 7
    %v824 = vsub.s32 0, %v823
    %v825 = vrot.slane %v814, %v824
    %v826 = vlaneseq
    %v827 = vshrl.u32 %v826, 7
    %v828 = vsub.s32 0, %v827
    %v829 = vrot.slane %v821, %v828
    %v832 = vadd.f32 %v795, %v825
    %v833 = vadd.f32 %v796, %v825
    %v834 = vadd.f32 %v797, %v829
    %v835 = vadd.f32 %v798, %v829
    %v836 = vadd.f32 %v832, %v833
    %v837 = vadd.f32 %v836, %v834
    %v838 = vadd.f32 %v837, %v835
    %v839 = vrot.slane %v838, 4
    %v840 = vadd.f32 %v838, %v839
    %v841 = vrot.slane %v840, 2
    %v842 = vadd.f32 %v840, %v841
    %v843 = vrot.slane %v842, 1
    %v844 = vadd.f32 %v842, %v843
    %v845 = vmul.f32 %v832, %v832
    %v846 = vmul.f32 %v833, %v833
    %v847 = vmul.f32 %v834, %v834
    %v848 = vmul.f32 %v835, %v835
    %v849 = vadd.f32 %v845, %v846
    %v850 = vadd.f32 %v849, %v847
    %v851 = vadd.f32 %v850, %v848
    %v852 = vrot.slane %v851, 4
    %v853 = vadd.f32 %v851, %v852
    %v854 = vrot.slane %v853, 2
    %v855 = vadd.f32 %v853, %v854
    %v856 = vrot.slane %v855, 1
    %v857 = vadd.f32 %v855, %v856
    %v858 = vsel %vm173, %v844, %v857
    %v859 = vld [vmem:[#allocation10] sm:$0xff]
    %v860 = vld [vmem:[#allocation10 + $0x8] sm:$0xff]
    %v861 = vld [vmem:[#allocation10 + $0x10] sm:$0xff]
    %v862 = vld [vmem:[#allocation10 + $0x18] sm:$0xff]
    %v863 = vld [vmem:[#allocation10 + $0x20] sm:$0xff]
    %v864 = vld [vmem:[#allocation10 + $0x28] sm:$0xff]
    %v865 = vld [vmem:[#allocation10 + $0x30] sm:$0xff]
    %v866 = vld [vmem:[#allocation10 + $0x38] sm:$0xff]
    %v867 = vld [vmem:[#allocation10 + $0x40] sm:$0xff]
    %v868 = vld [vmem:[#allocation10 + $0x48] sm:$0xff]
    %v869 = vld [vmem:[#allocation10 + $0x50] sm:$0xff]
    %v870 = vld [vmem:[#allocation10 + $0x58] sm:$0xff]
    %v871 = vld [vmem:[#allocation10 + $0x60] sm:$0xff]
    %v872 = vld [vmem:[#allocation10 + $0x68] sm:$0xff]
    %v873 = vld [vmem:[#allocation10 + $0x70] sm:$0xff]
    %v874 = vld [vmem:[#allocation10 + $0x78] sm:$0xff]
    %875 = vmatprep.subr.mxu0 0.0
    %876 = vmatpush1.msra.mxu0 %v859
    %877 = vmatprep.subr.mxu0 0.0
    %878 = vmatpush1.msra.mxu0 %v860
    %879 = vmatprep.subr.mxu0 0.0
    %880 = vmatpush1.msra.mxu0 %v861
    %881 = vmatprep.subr.mxu0 0.0
    %882 = vmatpush1.msra.mxu0 %v862
    %883 = vmatprep.subr.mxu0 0.0
    %884 = vmatpush1.msra.mxu0 %v863
    %885 = vmatprep.subr.mxu0 0.0
    %886 = vmatpush1.msra.mxu0 %v864
    %887 = vmatprep.subr.mxu0 0.0
    %888 = vmatpush1.msra.mxu0 %v865
    %889 = vmatprep.subr.mxu0 0.0
    %890 = vmatpush1.msra.mxu0 %v866
    %891 = vmatprep.subr.mxu0 0.0
    %892 = vmatpush1.msra.mxu0 %v867
    %893 = vmatprep.subr.mxu0 0.0
    %894 = vmatpush1.msra.mxu0 %v868
    %895 = vmatprep.subr.mxu0 0.0
    %896 = vmatpush1.msra.mxu0 %v869
    %897 = vmatprep.subr.mxu0 0.0
    %898 = vmatpush1.msra.mxu0 %v870
    %899 = vmatprep.subr.mxu0 0.0
    %900 = vmatpush1.msra.mxu0 %v871
    %901 = vmatprep.subr.mxu0 0.0
    %902 = vmatpush1.msra.mxu0 %v872
    %903 = vmatprep.subr.mxu0 0.0
    %904 = vmatpush1.msra.mxu0 %v873
    %905 = vmatprep.subr.mxu0 0.0
    %906 = vmatpush1.msra.mxu0 %v874
    %907 = vmatprep.subr.mxu0 0.0
    %908 = vmatpush1.msra.mxu0 0.0
    %909 = vmatprep.subr.mxu0 0.0
    %910 = vmatpush1.msra.mxu0 0.0
    %911 = vmatprep.subr.mxu0 0.0
    %912 = vmatpush1.msra.mxu0 0.0
    %913 = vmatprep.subr.mxu0 0.0
    %914 = vmatpush1.msra.mxu0 0.0
    %915 = vmatprep.subr.mxu0 0.0
    %916 = vmatpush1.msra.mxu0 0.0
    %917 = vmatprep.subr.mxu0 0.0
    %918 = vmatpush1.msra.mxu0 0.0
    %919 = vmatprep.subr.mxu0 0.0
    %920 = vmatpush1.msra.mxu0 0.0
    %921 = vmatprep.subr.mxu0 0.0
    %922 = vmatpush1.msra.mxu0 0.0
    %923 = vmatprep.subr.mxu0 0.0
    %924 = vmatpush1.msra.mxu0 0.0
    %925 = vmatprep.subr.mxu0 0.0
    %926 = vmatpush1.msra.mxu0 0.0
    %927 = vmatprep.subr.mxu0 0.0
    %928 = vmatpush1.msra.mxu0 0.0
    %929 = vmatprep.subr.mxu0 0.0
    %930 = vmatpush1.msra.mxu0 0.0
    %931 = vmatprep.subr.mxu0 0.0
    %932 = vmatpush1.msra.mxu0 0.0
    %933 = vmatprep.subr.mxu0 0.0
    %934 = vmatpush1.msra.mxu0 0.0
    %935 = vmatprep.subr.mxu0 0.0
    %936 = vmatpush1.msra.mxu0 0.0
    %937 = vmatprep.subr.mxu0 0.0
    %938 = vmatpush1.msra.mxu0 0.0
    %939 = vmatprep.mubr.f32.mxu0 0.0
    %940 = vmatmul.mubr.f32.gmra.mrb[0].mxu0 %v858
    %v941 = vpop.f32.mrb[0].mxu0
    %v942 = vadd.f32 0.0, %v941
    %v943 = vpop.f32.mrb[0].mxu0
    %944 = vdwg.mxu0
    %v945 = vmul.f32 %v942, %v942
    %v947 = vrot.slane %v945, 7
    %v949 = vsub.f32 %v942, %v947
    %v950 = vld [vmem:[%s9] sm:$0x1]
    %v951 = vadd.f32 %v949, 1e-05
    %v952 = vrsqrt.pop %v951
    %v955 = vunpack.c.l.s4 1966171168
    %v956 = vunpack.c.0.s8 %v955
    %v957 = vlaneseq
    %v958 = vshrl.u32 %v957, 7
    %v959 = vsub.s32 %v956, %v958
    %v960 = vrot.slane %v952, %v959
    %v961 = vcombine.high %v960, %v960
    %v963 = vunpack.c.l.s4 1966171168
    %v964 = vunpack.c.0.s8 %v963
    %v965 = vlaneseq
    %v966 = vshrl.u32 %v965, 7
    %v967 = vsub.s32 %v964, %v966
    %v968 = vrot.slane %v961, %v967
    %v970 = vmul.f32 %v950, %v968
    %v971 = vld [vmem:[%s10] sm:$0x1]
    %v972 = vmul.f32 %v942, %v970
    %v973 = vsub.f32 %v971, %v972
    %v975 = vlaneseq
    %v976 = vshrl.u32 %v975, 7
    %v977 = vsub.s32 0, %v976
    %v978 = vrot.slane %v970, %v977
    %v980 = vmul.f32 %v832, %v978
    %v981 = vmul.f32 %v833, %v978
    %v982 = vmul.f32 %v834, %v978
    %v983 = vmul.f32 %v835, %v978
    %v985 = vlaneseq
    %v986 = vshrl.u32 %v985, 7
    %v987 = vsub.s32 0, %v986
    %v988 = vrot.slane %v973, %v987
    %v990 = vadd.f32 %v980, %v988
    %v991 = vadd.f32 %v981, %v988
    %v992 = vadd.f32 %v982, %v988
    %v993 = vadd.f32 %v983, %v988
    %v994 = vxor.u32 %v990, 2147483648
    %v995 = vxor.u32 %v991, 2147483648
    %v996 = vxor.u32 %v992, 2147483648
    %v997 = vxor.u32 %v993, 2147483648
    %v998 = vmul.f32 %v994, 1.442695
    %v999 = vpow.pop %v998
    %v1000 = vmul.f32 %v995, 1.442695
    %v1001 = vpow.pop %v1000
    %v1002 = vmul.f32 %v996, 1.442695
    %v1003 = vpow.pop %v1002
    %v1004 = vmul.f32 %v997, 1.442695
    %v1005 = vpow.pop %v1004
    %v1006 = vadd.f32 %v999, 1.0
    %v1007 = vadd.f32 %v1001, 1.0
    %v1008 = vadd.f32 %v1003, 1.0
    %v1009 = vadd.f32 %v1005, 1.0
    %v1010 = vrcp.pop %v1006
    %v1011 = vmul.f32 1.0, %v1010
    %v1012 = vrcp.pop %v1007
    %v1013 = vmul.f32 1.0, %v1012
    %v1014 = vrcp.pop %v1008
    %v1015 = vmul.f32 1.0, %v1014
    %v1016 = vrcp.pop %v1009
    %v1017 = vmul.f32 1.0, %v1016
    %v1018 = vmul.f32 %v990, %v1011
    %v1019 = vmul.f32 %v991, %v1013
    %v1020 = vmul.f32 %v992, %v1015
    %v1021 = vmul.f32 %v993, %v1017
    %v1022 = vpack.c.bf16 %v1019, %v1018
    %v1023 = vpack.c.bf16 %v1021, %v1020
    %v1025 = vshrl.u32 %v1022, 16
    %v1027 = vrot.slane %v1025, 7
    %v1028 = vshll.u32 %v1022, 16
    %v1030 = vor.u32 %v1027, %v1028
    %v1032 = vshrl.u32 %v1023, 16
    %v1034 = vrot.slane %v1032, 7
    %v1035 = vshll.u32 %v1023, 16
    %v1037 = vor.u32 %v1034, %v1035
    %v1040 = vsel %vm358, 0, %v1030
    %v1041 = vsel %vm358, 0, %v1037
    %v1042 = vrot.slane %v1028, 1
    %v1043 = vor.u32 %v1025, %v1042
    %v1044 = vrot.slane %v1035, 1
    %v1045 = vor.u32 %v1032, %v1044
    %v1048 = vsel %vm369, %v1043, 0
    %v1049 = vsel %vm369, %v1045, 0
    %v1050 = vld [vmem:[#allocation11] sm:$0xf]
    %v1051 = vld [vmem:[#allocation11 + $0x4] sm:$0xf]
    %v1052 = vld [vmem:[#allocation11 + $0x8] sm:$0xf]
    %v1053 = vld [vmem:[#allocation11 + $0xc] sm:$0xf]
    %v1054 = vld [vmem:[#allocation11 + $0x10] sm:$0xf]
    %v1055 = vld [vmem:[#allocation11 + $0x14] sm:$0xf]
    %v1056 = vld [vmem:[#allocation11 + $0x18] sm:$0xf]
    %v1057 = vld [vmem:[#allocation11 + $0x1c] sm:$0xf]
    %v1058 = vld [vmem:[#allocation11 + $0x20] sm:$0xf]
    %v1059 = vld [vmem:[#allocation11 + $0x24] sm:$0xf]
    %v1060 = vld [vmem:[#allocation11 + $0x28] sm:$0xf]
    %v1061 = vld [vmem:[#allocation11 + $0x2c] sm:$0xf]
    %v1062 = vld [vmem:[#allocation11 + $0x30] sm:$0xf]
    %v1063 = vld [vmem:[#allocation11 + $0x34] sm:$0xf]
    %v1064 = vld [vmem:[#allocation11 + $0x38] sm:$0xf]
    %v1065 = vld [vmem:[#allocation11 + $0x3c] sm:$0xf]
    %v1066 = vld [vmem:[#allocation11 + $0x40] sm:$0xf]
    %v1067 = vld [vmem:[#allocation11 + $0x44] sm:$0xf]
    %v1068 = vld [vmem:[#allocation11 + $0x48] sm:$0xf]
    %v1069 = vld [vmem:[#allocation11 + $0x4c] sm:$0xf]
    %v1070 = vld [vmem:[#allocation11 + $0x50] sm:$0xf]
    %v1071 = vld [vmem:[#allocation11 + $0x54] sm:$0xf]
    %v1072 = vld [vmem:[#allocation11 + $0x58] sm:$0xf]
    %v1073 = vld [vmem:[#allocation11 + $0x5c] sm:$0xf]
    %v1074 = vld [vmem:[#allocation11 + $0x60] sm:$0xf]
    %v1075 = vld [vmem:[#allocation11 + $0x64] sm:$0xf]
    %v1076 = vld [vmem:[#allocation11 + $0x68] sm:$0xf]
    %v1077 = vld [vmem:[#allocation11 + $0x6c] sm:$0xf]
    %v1078 = vld [vmem:[#allocation11 + $0x70] sm:$0xf]
    %v1079 = vld [vmem:[#allocation11 + $0x74] sm:$0xf]
    %v1080 = vld [vmem:[#allocation11 + $0x78] sm:$0xf]
    %v1081 = vld [vmem:[#allocation11 + $0x7c] sm:$0xf]
    %v1082 = vld [vmem:[#allocation11 + $0x80] sm:$0xf]
    %v1083 = vld [vmem:[#allocation11 + $0x84] sm:$0xf]
    %v1084 = vld [vmem:[#allocation11 + $0x88] sm:$0xf]
    %v1085 = vld [vmem:[#allocation11 + $0x8c] sm:$0xf]
    %v1086 = vld [vmem:[#allocation11 + $0x90] sm:$0xf]
    %v1087 = vld [vmem:[#allocation11 + $0x94] sm:$0xf]
    %v1088 = vld [vmem:[#allocation11 + $0x98] sm:$0xf]
    %v1089 = vld [vmem:[#allocation11 + $0x9c] sm:$0xf]
    %v1090 = vld [vmem:[#allocation11 + $0xa0] sm:$0xf]
    %v1091 = vld [vmem:[#allocation11 + $0xa4] sm:$0xf]
    %v1092 = vld [vmem:[#allocation11 + $0xa8] sm:$0xf]
    %v1093 = vld [vmem:[#allocation11 + $0xac] sm:$0xf]
    %v1094 = vld [vmem:[#allocation11 + $0xb0] sm:$0xf]
    %v1095 = vld [vmem:[#allocation11 + $0xb4] sm:$0xf]
    %v1096 = vld [vmem:[#allocation11 + $0xb8] sm:$0xf]
    %v1097 = vld [vmem:[#allocation11 + $0xbc] sm:$0xf]
    %v1098 = vpack.c.bf16 %v148, %v147
    %v1099 = vpack.c.bf16 %v150, %v149
    %v1100 = vld [vmem:[#allocation13] sm:$0xf]
    %v1101 = vld [vmem:[#allocation13 + $0x4] sm:$0xf]
    %v1102 = vld [vmem:[#allocation13 + $0x8] sm:$0xf]
    %v1103 = vld [vmem:[#allocation13 + $0xc] sm:$0xf]
    %v1104 = vld [vmem:[#allocation13 + $0x10] sm:$0xf]
    %v1105 = vld [vmem:[#allocation13 + $0x14] sm:$0xf]
    %v1106 = vld [vmem:[#allocation13 + $0x18] sm:$0xf]
    %v1107 = vld [vmem:[#allocation13 + $0x1c] sm:$0xf]
    %v1108 = vld [vmem:[#allocation13 + $0x20] sm:$0xf]
    %v1109 = vld [vmem:[#allocation13 + $0x24] sm:$0xf]
    %v1110 = vld [vmem:[#allocation13 + $0x28] sm:$0xf]
    %v1111 = vld [vmem:[#allocation13 + $0x2c] sm:$0xf]
    %v1112 = vld [vmem:[#allocation13 + $0x30] sm:$0xf]
    %v1113 = vld [vmem:[#allocation13 + $0x34] sm:$0xf]
    %v1114 = vld [vmem:[#allocation13 + $0x38] sm:$0xf]
    %v1115 = vld [vmem:[#allocation13 + $0x3c] sm:$0xf]
    %v1132 = vunpack.c.l.b16 %v1100
    %v1133 = vunpack.c.l.b16 %v1101
    %v1134 = vunpack.c.l.b16 %v1102
    %v1135 = vunpack.c.l.b16 %v1103
    %v1136 = vunpack.c.l.b16 %v1104
    %v1137 = vunpack.c.l.b16 %v1105
    %v1138 = vunpack.c.l.b16 %v1106
    %v1139 = vunpack.c.l.b16 %v1107
    %v1140 = vunpack.c.l.b16 %v1108
    %v1141 = vunpack.c.l.b16 %v1109
    %v1142 = vunpack.c.l.b16 %v1110
    %v1143 = vunpack.c.l.b16 %v1111
    %v1144 = vunpack.c.l.b16 %v1112
    %v1145 = vunpack.c.l.b16 %v1113
    %v1146 = vunpack.c.l.b16 %v1114
    %v1147 = vunpack.c.l.b16 %v1115
    %v1148 = vpack.c.b16 %v1133, %v1132
    %v1149 = vpack.c.b16 %v1135, %v1134
    %v1150 = vpack.c.b16 %v1137, %v1136
    %v1151 = vpack.c.b16 %v1139, %v1138
    %v1152 = vpack.c.b16 %v1141, %v1140
    %v1153 = vpack.c.b16 %v1143, %v1142
    %v1154 = vpack.c.b16 %v1145, %v1144
    %v1155 = vpack.c.b16 %v1147, %v1146
    %1164 = vmatprep.subr.bf16.mxu0 0
    %1165 = vmatpush1.bf16.msra.mxu0 %v1148
    %1166 = vmatprep.subr.bf16.mxu0 0
    %1167 = vmatpush1.bf16.msra.mxu0 %v1149
    %1168 = vmatprep.subr.bf16.mxu0 0
    %1169 = vmatpush1.bf16.msra.mxu0 %v1150
    %1170 = vmatprep.subr.bf16.mxu0 0
    %1171 = vmatpush1.bf16.msra.mxu0 %v1151
    %1172 = vmatprep.subr.bf16.mxu0 0
    %1173 = vmatpush1.bf16.msra.mxu0 %v1152
    %1174 = vmatprep.subr.bf16.mxu0 0
    %1175 = vmatpush1.bf16.msra.mxu0 %v1153
    %1176 = vmatprep.subr.bf16.mxu0 0
    %1177 = vmatpush1.bf16.msra.mxu0 %v1154
    %1178 = vmatprep.subr.bf16.mxu0 0
    %1179 = vmatpush1.bf16.msra.mxu0 %v1155
    %1180 = vmatprep.subr.bf16.mxu0 0
    %1181 = vmatpush1.bf16.msra.mxu0 0
    %1182 = vmatprep.subr.bf16.mxu0 0
    %1183 = vmatpush1.bf16.msra.mxu0 0
    %1184 = vmatprep.subr.bf16.mxu0 0
    %1185 = vmatpush1.bf16.msra.mxu0 0
    %1186 = vmatprep.subr.bf16.mxu0 0
    %1187 = vmatpush1.bf16.msra.mxu0 0
    %1188 = vmatprep.subr.bf16.mxu0 0
    %1189 = vmatpush1.bf16.msra.mxu0 0
    %1190 = vmatprep.subr.bf16.mxu0 0
    %1191 = vmatpush1.bf16.msra.mxu0 0
    %1192 = vmatprep.subr.bf16.mxu0 0
    %1193 = vmatpush1.bf16.msra.mxu0 0
    %1194 = vmatprep.subr.bf16.mxu0 0
    %1195 = vmatpush1.bf16.msra.mxu0 0
    %1196 = vmatprep.mubr.bf16.mxu0 0
    %1197 = vmatmul.mubr.bf16.gmra.mrb[0].mxu0 %v1098
    %v1198 = vpop.f32.mrb[0].mxu0
    %v1199 = vadd.f32 0.0, %v1198
    %v1200 = vpop.f32.mrb[0].mxu0
    %v1201 = vpop.f32.mrb[0].mxu0
    %v1202 = vadd.f32 0.0, %v1201
    %v1203 = vpop.f32.mrb[0].mxu0
    %1204 = vmatprep.mubr.bf16.mxu0 0
    %1205 = vmatmul.mubr.bf16.gmra.mrb[0].mxu0 %v1099
    %v1206 = vpop.f32.mrb[0].mxu0
    %v1207 = vadd.f32 0.0, %v1206
    %v1208 = vpop.f32.mrb[0].mxu0
    %v1209 = vpop.f32.mrb[0].mxu0
    %v1210 = vadd.f32 0.0, %v1209
    %v1211 = vpop.f32.mrb[0].mxu0
    %1212 = vdwg.mxu0
    %v1261 = vunpack.c.l.b16 %v1050
    %v1262 = vunpack.c.l.b16 %v1051
    %v1263 = vunpack.c.l.b16 %v1052
    %v1264 = vunpack.c.l.b16 %v1053
    %v1265 = vunpack.c.l.b16 %v1054
    %v1266 = vunpack.c.l.b16 %v1055
    %v1267 = vunpack.c.l.b16 %v1056
    %v1268 = vunpack.c.l.b16 %v1057
    %v1269 = vunpack.c.l.b16 %v1058
    %v1270 = vunpack.c.l.b16 %v1059
    %v1271 = vunpack.c.l.b16 %v1060
    %v1272 = vunpack.c.l.b16 %v1061
    %v1273 = vunpack.c.l.b16 %v1062
    %v1274 = vunpack.c.l.b16 %v1063
    %v1275 = vunpack.c.l.b16 %v1064
    %v1276 = vunpack.c.l.b16 %v1065
    %v1277 = vunpack.c.l.b16 %v1066
    %v1278 = vunpack.c.l.b16 %v1067
    %v1279 = vunpack.c.l.b16 %v1068
    %v1280 = vunpack.c.l.b16 %v1069
    %v1281 = vunpack.c.l.b16 %v1070
    %v1282 = vunpack.c.l.b16 %v1071
    %v1283 = vunpack.c.l.b16 %v1072
    %v1284 = vunpack.c.l.b16 %v1073
    %v1285 = vunpack.c.l.b16 %v1074
    %v1286 = vunpack.c.l.b16 %v1075
    %v1287 = vunpack.c.l.b16 %v1076
    %v1288 = vunpack.c.l.b16 %v1077
    %v1289 = vunpack.c.l.b16 %v1078
    %v1290 = vunpack.c.l.b16 %v1079
    %v1291 = vunpack.c.l.b16 %v1080
    %v1292 = vunpack.c.l.b16 %v1081
    %v1293 = vunpack.c.l.b16 %v1082
    %v1294 = vunpack.c.l.b16 %v1083
    %v1295 = vunpack.c.l.b16 %v1084
    %v1296 = vunpack.c.l.b16 %v1085
    %v1297 = vunpack.c.l.b16 %v1086
    %v1298 = vunpack.c.l.b16 %v1087
    %v1299 = vunpack.c.l.b16 %v1088
    %v1300 = vunpack.c.l.b16 %v1089
    %v1301 = vunpack.c.l.b16 %v1090
    %v1302 = vunpack.c.l.b16 %v1091
    %v1303 = vunpack.c.l.b16 %v1092
    %v1304 = vunpack.c.l.b16 %v1093
    %v1305 = vunpack.c.l.b16 %v1094
    %v1306 = vunpack.c.l.b16 %v1095
    %v1307 = vunpack.c.l.b16 %v1096
    %v1308 = vunpack.c.l.b16 %v1097
    %v1309 = vpack.c.b16 %v1262, %v1261
    %v1310 = vpack.c.b16 %v1264, %v1263
    %v1311 = vpack.c.b16 %v1266, %v1265
    %v1312 = vpack.c.b16 %v1268, %v1267
    %v1313 = vpack.c.b16 %v1270, %v1269
    %v1314 = vpack.c.b16 %v1272, %v1271
    %v1315 = vpack.c.b16 %v1274, %v1273
    %v1316 = vpack.c.b16 %v1276, %v1275
    %v1317 = vpack.c.b16 %v1278, %v1277
    %v1318 = vpack.c.b16 %v1280, %v1279
    %v1319 = vpack.c.b16 %v1282, %v1281
    %v1320 = vpack.c.b16 %v1284, %v1283
    %v1321 = vpack.c.b16 %v1286, %v1285
    %v1322 = vpack.c.b16 %v1288, %v1287
    %v1323 = vpack.c.b16 %v1290, %v1289
    %v1324 = vpack.c.b16 %v1292, %v1291
    %v1325 = vpack.c.b16 %v1294, %v1293
    %v1326 = vpack.c.b16 %v1296, %v1295
    %v1327 = vpack.c.b16 %v1298, %v1297
    %v1328 = vpack.c.b16 %v1300, %v1299
    %v1329 = vpack.c.b16 %v1302, %v1301
    %v1330 = vpack.c.b16 %v1304, %v1303
    %v1331 = vpack.c.b16 %v1306, %v1305
    %v1332 = vpack.c.b16 %v1308, %v1307
    %1357 = vmatprep.subr.bf16.mxu0 0
    %1358 = vmatpush1.bf16.msra.mxu0 %v1309
    %1359 = vmatprep.subr.bf16.mxu0 0
    %1360 = vmatpush1.bf16.msra.mxu0 %v1310
    %1361 = vmatprep.subr.bf16.mxu0 0
    %1362 = vmatpush1.bf16.msra.mxu0 %v1311
    %1363 = vmatprep.subr.bf16.mxu0 0
    %1364 = vmatpush1.bf16.msra.mxu0 %v1312
    %1365 = vmatprep.subr.bf16.mxu0 0
    %1366 = vmatpush1.bf16.msra.mxu0 %v1313
    %1367 = vmatprep.subr.bf16.mxu0 0
    %1368 = vmatpush1.bf16.msra.mxu0 %v1314
    %1369 = vmatprep.subr.bf16.mxu0 0
    %1370 = vmatpush1.bf16.msra.mxu0 %v1315
    %1371 = vmatprep.subr.bf16.mxu0 0
    %1372 = vmatpush1.bf16.msra.mxu0 %v1316
    %1373 = vmatprep.subr.bf16.mxu0 0
    %1374 = vmatpush1.bf16.msra.mxu0 %v1317
    %1375 = vmatprep.subr.bf16.mxu0 0
    %1376 = vmatpush1.bf16.msra.mxu0 %v1318
    %1377 = vmatprep.subr.bf16.mxu0 0
    %1378 = vmatpush1.bf16.msra.mxu0 %v1319
    %1379 = vmatprep.subr.bf16.mxu0 0
    %1380 = vmatpush1.bf16.msra.mxu0 %v1320
    %1381 = vmatprep.subr.bf16.mxu0 0
    %1382 = vmatpush1.bf16.msra.mxu0 %v1321
    %1383 = vmatprep.subr.bf16.mxu0 0
    %1384 = vmatpush1.bf16.msra.mxu0 %v1322
    %1385 = vmatprep.subr.bf16.mxu0 0
    %1386 = vmatpush1.bf16.msra.mxu0 %v1323
    %1387 = vmatprep.subr.bf16.mxu0 0
    %1388 = vmatpush1.bf16.msra.mxu0 %v1324
    %1389 = vmatprep.mubr.bf16.mxu0 %v1022
    %1390 = vmatmul.mubr.bf16.gmra.mrb[0].mxu0 %v1040
    %v1391 = vpop.f32.mrb[0].mxu0
    %v1392 = vadd.f32 %v1199, %v1391
    %v1393 = vpop.f32.mrb[0].mxu0
    %v1394 = vpop.f32.mrb[0].mxu0
    %v1395 = vadd.f32 %v1202, %v1394
    %v1396 = vpop.f32.mrb[0].mxu0
    %1397 = vmatprep.mubr.bf16.mxu0 %v1023
    %1398 = vmatmul.mubr.bf16.gmra.mrb[0].mxu0 %v1041
    %v1399 = vpop.f32.mrb[0].mxu0
    %v1400 = vadd.f32 %v1207, %v1399
    %v1401 = vpop.f32.mrb[0].mxu0
    %v1402 = vpop.f32.mrb[0].mxu0
    %v1403 = vadd.f32 %v1210, %v1402
    %v1404 = vpop.f32.mrb[0].mxu0
    %1405 = vdwg.mxu0
    %1406 = vmatprep.subr.bf16.mxu0 0
    %1407 = vmatpush1.bf16.msra.mxu0 %v1325
    %1408 = vmatprep.subr.bf16.mxu0 0
    %1409 = vmatpush1.bf16.msra.mxu0 %v1326
    %1410 = vmatprep.subr.bf16.mxu0 0
    %1411 = vmatpush1.bf16.msra.mxu0 %v1327
    %1412 = vmatprep.subr.bf16.mxu0 0
    %1413 = vmatpush1.bf16.msra.mxu0 %v1328
    %1414 = vmatprep.subr.bf16.mxu0 0
    %1415 = vmatpush1.bf16.msra.mxu0 %v1329
    %1416 = vmatprep.subr.bf16.mxu0 0
    %1417 = vmatpush1.bf16.msra.mxu0 %v1330
    %1418 = vmatprep.subr.bf16.mxu0 0
    %1419 = vmatpush1.bf16.msra.mxu0 %v1331
    %1420 = vmatprep.subr.bf16.mxu0 0
    %1421 = vmatpush1.bf16.msra.mxu0 %v1332
    %1422 = vmatprep.subr.bf16.mxu0 0
    %1423 = vmatpush1.bf16.msra.mxu0 0
    %1424 = vmatprep.subr.bf16.mxu0 0
    %1425 = vmatpush1.bf16.msra.mxu0 0
    %1426 = vmatprep.subr.bf16.mxu0 0
    %1427 = vmatpush1.bf16.msra.mxu0 0
    %1428 = vmatprep.subr.bf16.mxu0 0
    %1429 = vmatpush1.bf16.msra.mxu0 0
    %1430 = vmatprep.subr.bf16.mxu0 0
    %1431 = vmatpush1.bf16.msra.mxu0 0
    %1432 = vmatprep.subr.bf16.mxu0 0
    %1433 = vmatpush1.bf16.msra.mxu0 0
    %1434 = vmatprep.subr.bf16.mxu0 0
    %1435 = vmatpush1.bf16.msra.mxu0 0
    %1436 = vmatprep.subr.bf16.mxu0 0
    %1437 = vmatpush1.bf16.msra.mxu0 0
    %1438 = vmatprep.mubr.bf16.mxu0 0
    %1439 = vmatmul.mubr.bf16.gmra.mrb[0].mxu0 %v1048
    %v1440 = vpop.f32.mrb[0].mxu0
    %v1441 = vadd.f32 %v1392, %v1440
    %v1442 = vpop.f32.mrb[0].mxu0
    %v1443 = vpop.f32.mrb[0].mxu0
    %v1444 = vadd.f32 %v1395, %v1443
    %v1445 = vpop.f32.mrb[0].mxu0
    %1446 = vmatprep.mubr.bf16.mxu0 0
    %1447 = vmatmul.mubr.bf16.gmra.mrb[0].mxu0 %v1049
    %v1448 = vpop.f32.mrb[0].mxu0
    %v1449 = vadd.f32 %v1400, %v1448
    %v1450 = vpop.f32.mrb[0].mxu0
    %v1451 = vpop.f32.mrb[0].mxu0
    %v1452 = vadd.f32 %v1403, %v1451
    %v1453 = vpop.f32.mrb[0].mxu0
    %1454 = vdwg.mxu0
    %v1455 = vld [vmem:[%s14] sm:$0x1]
    %v1457 = vlaneseq
    %v1458 = vshrl.u32 %v1457, 7
    %v1459 = vsub.s32 0, %v1458
    %v1460 = vrot.slane %v1455, %v1459
    %v1462 = vadd.f32 %v1441, %v1460
    %v1463 = vadd.f32 %v1444, %v1460
    %v1464 = vadd.f32 %v1449, %v1460
    %v1465 = vadd.f32 %v1452, %v1460
    %1466 = vst [vmem:[#allocation14] sm:$0xff] %v1462
    %1467 = vst [vmem:[#allocation14 + $0x8] sm:$0xff] %v1463
    %1468 = vst [vmem:[#allocation14 + $0x10] sm:$0xff] %v1464
    %1469 = vst [vmem:[#allocation14 + $0x18] sm:$0xff] %v1465
    // Predicated region
    $region90: #{tpu_custom_call.1} parent=1 // pred_check
      _
    $region91: #{tpu_custom_call.1} parent=1 // pred_check_branch
      %1471 = sbr.rel (0) target = $region93
    $region92: #{tpu_custom_call.1} parent=1 // pred_region
      %s1473 = ssub.s32 512, 512
      %1474 = vsyncadd [#allocation4], %s1473
      %s1475 = sshll.u32 [#allocation14], 4
      %s1476 = int_to_ptr.vmem [resolvable:$true] %s1475
      %1481 = dma.vmem_to_hbm [thread:$0]  %s1476, 512, %s15, [#allocation4], 128, 128, 8
    $region93: #{tpu_custom_call.1} parent=1 // pred_fallthru
      _
    // Predicated region
    $region94: #{tpu_custom_call.1} parent=1 // pred_check
      _
    $region95: #{tpu_custom_call.1} parent=1 // pred_check_branch
      %1483 = sbr.rel (0) target = $region97
    $region96: #{tpu_custom_call.1} parent=1 // pred_region
      %1484 = dma.done [#allocation4], 512
    $region97: #{tpu_custom_call.1} parent=1 // pred_fallthru
      _
    %1485 = vsyncpa [#allocation3], 1
    %1486 = vsyncpa [#allocation6], 1
    %1487 = vsyncpa [#allocation9], 1
    %1488 = vsyncpa [#allocation12], 1
    %1489 = vsyncpa [#allocation4], 1

</llo_original>
